<compile_context>
chip_gen: v5e
topology: v5e:2x2
jax: 0.10.0
libtpu: 0.0.40
codegen_flags: <defaults>
</compile_context>

<pallas_src>
import functools
import math

import jax
import jax.numpy as jnp
from jax import lax
from jax.experimental import pallas as pl
from jax.experimental.pallas import tpu as pltpu


def _softmax_last(s):
    m = jnp.max(s, axis=-1, keepdims=True)
    e = jnp.exp(s - m)
    denom = jnp.sum(e, axis=-1, keepdims=True)
    # EUP reciprocal instead of an (N,N) VALU divide.
    return e * pl.reciprocal(denom, approx=True)


def _qkT(a, b):
    # (N, d) x (M, d) -> (N, M), contracting the last dim of both (no explicit .T).
    return lax.dot_general(a, b, (((1,), (1,)), ((), ())),
                           preferred_element_type=jnp.float32)


def ds_attention_kernel(n_heads, d_head, dim,
                        x_ref, f_ref,
                        wl_ref, bl_ref,       # fused conv1 -> (l_q/scale, l_k, l_v)
                        wg_ref, bg_ref,       # fused (g_q/scale, g_k, g_v)
                        wm1_ref, wm2_ref,     # conMerge split per head: (H, dh, dim)
                        bm_ref,
                        o_ref):
    x = x_ref[0]                                      # (N, Cin) f32
    f = f_ref[0]                                      # (N, dim) f32
    n = x.shape[0]

    # Two fused projection matmuls (Q already pre-scaled by 1/sqrt(d_head)).
    L = jnp.dot(x, wl_ref[...], preferred_element_type=jnp.float32) + bl_ref[...]
    G = jnp.dot(f, wg_ref[...], preferred_element_type=jnp.float32) + bg_ref[...]

    lq, lk, lv = L[:, 0:dim], L[:, dim:2 * dim], L[:, 2 * dim:3 * dim]
    gq, gk, gv = G[:, 0:dim], G[:, dim:2 * dim], G[:, 2 * dim:3 * dim]

    # Accumulate the merged projection directly: y = out1 @ wm[:dim] + out2 @ wm[dim:]
    # = sum_h o1_h @ wm1[h] + o2_h @ wm2[h]  -> no concatenation, one live (N, dim) acc.
    acc = jnp.zeros((n, dim), jnp.float32)
    for h in range(n_heads):
        sl = slice(h * d_head, (h + 1) * d_head)

        # attentionLG = softmax(L_Q @ G_K^T / scale) @ G_V   (atten_drop: identity, eval)
        p_lg = _softmax_last(_qkT(lq[:, sl], gk[:, sl]))
        o1 = jnp.dot(p_lg, gv[:, sl], preferred_element_type=jnp.float32)

        # attentionGL = softmax(G_Q @ L_K^T / scale) @ L_V
        p_gl = _softmax_last(_qkT(gq[:, sl], lk[:, sl]))
        o2 = jnp.dot(p_gl, lv[:, sl], preferred_element_type=jnp.float32)

        acc = (acc
               + jnp.dot(o1, wm1_ref[h], preferred_element_type=jnp.float32)
               + jnp.dot(o2, wm2_ref[h], preferred_element_type=jnp.float32))

    y = jnp.maximum(acc + bm_ref[...], 0.0)           # conMerge bias + ReLU, (N, dim)
    # Store transposed: output block is (dim, N) so the token axis sits on lanes.
    o_ref[0] = y.T.astype(o_ref.dtype)


def ds_attention(x_nchw, feat_nchw, params, n_heads):
    B, Cin, H, W = x_nchw.shape
    Bf, dim, Hf, Wf = feat_nchw.shape
    assert B == Bf and H * W == Hf * Wf, "m_power=None requires matching token counts"
    N = H * W
    dh = dim // n_heads
    inv_scale = 1.0 / math.sqrt(float(dh))

    # NCHW -> (B, N, C)  (pure layout plumbing on the host side)
    x = jnp.transpose(x_nchw, (0, 2, 3, 1)).reshape(B, N, Cin)
    f = jnp.transpose(feat_nchw, (0, 2, 3, 1)).reshape(B, N, dim)

    # ---- host-side weight fusion -------------------------------------------------
    # L path: x1 = x@wc1 + bc1 ; [LQ|LK|LV] = x1@[wlq|wlk|wlv] + [blq|blk|blv]
    #   => [LQ/s|LK|LV] = x @ (wc1 @ Wcat) + (bc1 @ Wcat + bcat), with 1/scale in Q cols.
    wl_cat = jnp.concatenate(
        [params['wlq'] * inv_scale, params['wlk'], params['wlv']], axis=1)   # (dim, 3*dim)
    bl_cat = jnp.concatenate(
        [params['blq'] * inv_scale, params['blk'], params['blv']], axis=1)   # (1, 3*dim)
    w_l = params['wc1'] @ wl_cat                                             # (Cin, 3*dim)
    b_l = params['bc1'] @ wl_cat + bl_cat                                    # (1, 3*dim)

    w_g = jnp.concatenate(
        [params['wgq'] * inv_scale, params['wgk'], params['wgv']], axis=1)   # (dim, 3*dim)
    b_g = jnp.concatenate(
        [params['bgq'] * inv_scale, params['bgk'], params['bgv']], axis=1)   # (1, 3*dim)

    # conMerge split to kill the concat: y = out1@wm[:dim] + out2@wm[dim:] + bm
    wm1 = params['wm'][:dim].reshape(n_heads, dh, dim)
    wm2 = params['wm'][dim:].reshape(n_heads, dh, dim)
    bm = params['bm']
    # -------------------------------------------------------------------------------

    weights = [w_l, b_l, w_g, b_g, wm1, wm2, bm]

    def wspec(a):
        nd = a.ndim
        return pl.BlockSpec(a.shape, lambda b, _nd=nd: (0,) * _nd)

    in_specs = ([pl.BlockSpec((1, N, Cin), lambda b: (b, 0, 0)),
                 pl.BlockSpec((1, N, dim), lambda b: (b, 0, 0))]
                + [wspec(a) for a in weights])

    kernel = functools.partial(ds_attention_kernel, n_heads, dh, dim)

    out = pl.pallas_call(
        kernel,
        out_shape=jax.ShapeDtypeStruct((B, dim, N), jnp.float32),
        grid_spec=pltpu.PrefetchScalarGridSpec(
            num_scalar_prefetch=0,
            grid=(B,),
            in_specs=in_specs,
            out_specs=pl.BlockSpec((1, dim, N), lambda b: (b, 0, 0)),
        ),
        compiler_params=pltpu.CompilerParams(dimension_semantics=("parallel",)),
    )(x, f, *weights)

    # (B, dim, N) is already channel-first; only a reshape is needed for NCHW.
    return out.reshape(B, dim, H, W)


def ref_forward(x_nchw, feat_nchw, p, n_heads):
    """Pure-JAX reference mirroring the PyTorch forward (eval mode), unfused params."""
    B, Cin, H, W = x_nchw.shape
    dim = p['wc1'].shape[1]
    dh = dim // n_heads
    N = H * W
    x = jnp.transpose(x_nchw, (0, 2, 3, 1)).reshape(B, N, Cin)
    f = jnp.transpose(feat_nchw, (0, 2, 3, 1)).reshape(B, N, dim)
    x1 = x @ p['wc1'] + p['bc1']

    def lin(a, w, b):
        return a @ p[w] + p[b]

    def heads(t):
        return t.reshape(B, N, n_heads, dh).transpose(0, 2, 1, 3)

    LQ, LK, LV = heads(lin(x1, 'wlq', 'blq')), heads(lin(x1, 'wlk', 'blk')), heads(lin(x1, 'wlv', 'blv'))
    GQ, GK, GV = heads(lin(f, 'wgq', 'bgq')), heads(lin(f, 'wgk', 'bgk')), heads(lin(f, 'wgv', 'bgv'))
    scale = math.sqrt(float(dh))
    a_lg = jax.nn.softmax(jnp.einsum('bhqd,bhkd->bhqk', LQ, GK) / scale, axis=-1)
    a_gl = jax.nn.softmax(jnp.einsum('bhqd,bhkd->bhqk', GQ, LK) / scale, axis=-1)
    o1 = jnp.einsum('bhqk,bhkd->bhqd', a_lg, GV).transpose(0, 2, 1, 3).reshape(B, N, dim)
    o2 = jnp.einsum('bhqk,bhkd->bhqd', a_gl, LV).transpose(0, 2, 1, 3).reshape(B, N, dim)
    merged = jnp.concatenate([o1, o2], axis=-1)
    y = jnp.maximum(merged @ p['wm'] + p['bm'], 0.0)
    return jnp.transpose(y.reshape(B, H, W, dim), (0, 3, 1, 2))


if __name__ == "__main__":
    # Small shapes consistent with the module (dim=48, n_heads=3 are the defaults;
    # in_channels shrunk from 1024 -> 64 and spatial to 8x8 for the demo).
    B, Cin, H, W = 2, 64, 8, 8
    dim, n_heads = 48, 3

    key = jax.random.PRNGKey(0)
    ks = jax.random.split(key, 20)

    def init_w(k, shape, scale=0.1):
        return (scale * jax.random.normal(k, shape)).astype(jnp.float32)

    params = {
        'wc1': init_w(ks[0], (Cin, dim)), 'bc1': init_w(ks[1], (1, dim)),
        'wlq': init_w(ks[2], (dim, dim)), 'blq': init_w(ks[3], (1, dim)),
        'wlk': init_w(ks[4], (dim, dim)), 'blk': init_w(ks[5], (1, dim)),
        'wlv': init_w(ks[6], (dim, dim)), 'blv': init_w(ks[7], (1, dim)),
        'wgq': init_w(ks[8], (dim, dim)), 'bgq': init_w(ks[9], (1, dim)),
        'wgk': init_w(ks[10], (dim, dim)), 'bgk': init_w(ks[11], (1, dim)),
        'wgv': init_w(ks[12], (dim, dim)), 'bgv': init_w(ks[13], (1, dim)),
        'wm': init_w(ks[14], (2 * dim, dim)), 'bm': init_w(ks[15], (1, dim)),
    }

    x = jax.random.normal(ks[16], (B, Cin, H, W), dtype=jnp.float32)
    feature = jax.random.normal(ks[17], (B, dim, H, W), dtype=jnp.float32)

    out = ds_attention(x, feature, params, n_heads)
    out = jax.block_until_ready(out)

    ref = ref_forward(x, feature, params, n_heads)
    assert out.shape == (B, dim, H, W)
    # Tolerance relaxed slightly because the kernel uses the approximate EUP
    # reciprocal for the softmax denominator; structural errors would be O(0.1+).
    assert jnp.allclose(out, ref, atol=1e-2, rtol=1e-2), "mismatch vs reference"

    print("KERNEL_OK")
</pallas_src>

<mosaic_0001>
module attributes {stable_mosaic.version = 11 : i64} {
  func.func @ds_attention_kernel(%arg0: i32, %arg1: memref<1x64x64xf32, #tpu.memory_space<vmem>>, %arg2: memref<1x64x48xf32, #tpu.memory_space<vmem>>, %arg3: memref<64x144xf32, #tpu.memory_space<vmem>>, %arg4: memref<1x144xf32, #tpu.memory_space<vmem>>, %arg5: memref<48x144xf32, #tpu.memory_space<vmem>>, %arg6: memref<1x144xf32, #tpu.memory_space<vmem>>, %arg7: memref<3x16x48xf32, #tpu.memory_space<vmem>>, %arg8: memref<3x16x48xf32, #tpu.memory_space<vmem>>, %arg9: memref<1x48xf32, #tpu.memory_space<vmem>>, %arg10: memref<1x48x64xf32, #tpu.memory_space<vmem>>) attributes {dimension_semantics = [#tpu.dimension_semantics<parallel>], iteration_bounds = array<i64: 2>, scalar_prefetch = 0 : i64, scratch_operands = 0 : i64, tpu.core_type = #tpu.core_type<tc>, window_params = [{transform_indices = @transform_0, window_bounds = array<i64: 1, 64, 64>}, {transform_indices = @transform_1, window_bounds = array<i64: 1, 64, 48>}, {pipeline_mode = #tpu.pipeline_mode<synchronous>, transform_indices = @transform_2, window_bounds = array<i64: 64, 144>}, {pipeline_mode = #tpu.pipeline_mode<synchronous>, transform_indices = @transform_3, window_bounds = array<i64: 1, 144>}, {pipeline_mode = #tpu.pipeline_mode<synchronous>, transform_indices = @transform_4, window_bounds = array<i64: 48, 144>}, {pipeline_mode = #tpu.pipeline_mode<synchronous>, transform_indices = @transform_5, window_bounds = array<i64: 1, 144>}, {pipeline_mode = #tpu.pipeline_mode<synchronous>, transform_indices = @transform_6, window_bounds = array<i64: 3, 16, 48>}, {pipeline_mode = #tpu.pipeline_mode<synchronous>, transform_indices = @transform_7, window_bounds = array<i64: 3, 16, 48>}, {pipeline_mode = #tpu.pipeline_mode<synchronous>, transform_indices = @transform_8, window_bounds = array<i64: 1, 48>}, {transform_indices = @transform_9, window_bounds = array<i64: 1, 48, 64>}]} {
    %c0 = arith.constant 0 : index
    %c0_0 = arith.constant 0 : index
    %c0_1 = arith.constant 0 : index
    %0 = vector.load %arg1[%c0, %c0_0, %c0_1] : memref<1x64x64xf32, #tpu.memory_space<vmem>>, vector<1x64x64xf32>
    %1 = vector.shape_cast %0 : vector<1x64x64xf32> to vector<64x64xf32>
    %c0_2 = arith.constant 0 : index
    %c0_3 = arith.constant 0 : index
    %c0_4 = arith.constant 0 : index
    %2 = vector.load %arg2[%c0_2, %c0_3, %c0_4] : memref<1x64x48xf32, #tpu.memory_space<vmem>>, vector<1x64x48xf32>
    %3 = vector.shape_cast %2 : vector<1x64x48xf32> to vector<64x48xf32>
    %c0_5 = arith.constant 0 : index
    %c0_6 = arith.constant 0 : index
    %4 = vector.load %arg3[%c0_5, %c0_6] : memref<64x144xf32, #tpu.memory_space<vmem>>, vector<64x144xf32>
    %cst = arith.constant dense<0.000000e+00> : vector<64x144xf32>
    %5 = tpu.matmul %1, %4, %cst {dimension_numbers = #tpu.dot_dimension_numbers<[1], [0], [0], [1], [0, 0, 1, 1], [], []>} : vector<64x64xf32>, vector<64x144xf32>, vector<64x144xf32> -> vector<64x144xf32>
    %c0_7 = arith.constant 0 : index
    %c0_8 = arith.constant 0 : index
    %6 = vector.load %arg4[%c0_7, %c0_8] : memref<1x144xf32, #tpu.memory_space<vmem>>, vector<1x144xf32>
    %7 = vector.broadcast %6 : vector<1x144xf32> to vector<64x144xf32>
    %8 = arith.addf %5, %7 : vector<64x144xf32>
    %c0_9 = arith.constant 0 : index
    %c0_10 = arith.constant 0 : index
    %9 = vector.load %arg5[%c0_9, %c0_10] : memref<48x144xf32, #tpu.memory_space<vmem>>, vector<48x144xf32>
    %cst_11 = arith.constant dense<0.000000e+00> : vector<64x144xf32>
    %10 = tpu.matmul %3, %9, %cst_11 {dimension_numbers = #tpu.dot_dimension_numbers<[1], [0], [0], [1], [0, 0, 1, 1], [], []>} : vector<64x48xf32>, vector<48x144xf32>, vector<64x144xf32> -> vector<64x144xf32>
    %c0_12 = arith.constant 0 : index
    %c0_13 = arith.constant 0 : index
    %11 = vector.load %arg6[%c0_12, %c0_13] : memref<1x144xf32, #tpu.memory_space<vmem>>, vector<1x144xf32>
    %12 = vector.broadcast %11 : vector<1x144xf32> to vector<64x144xf32>
    %13 = arith.addf %10, %12 : vector<64x144xf32>
    %14 = vector.extract_strided_slice %8 {offsets = [0, 0], sizes = [64, 48], strides = [1, 1]} : vector<64x144xf32> to vector<64x48xf32>
    %15 = vector.extract_strided_slice %8 {offsets = [0, 48], sizes = [64, 48], strides = [1, 1]} : vector<64x144xf32> to vector<64x48xf32>
    %16 = vector.extract_strided_slice %8 {offsets = [0, 96], sizes = [64, 48], strides = [1, 1]} : vector<64x144xf32> to vector<64x48xf32>
    %17 = vector.extract_strided_slice %13 {offsets = [0, 0], sizes = [64, 48], strides = [1, 1]} : vector<64x144xf32> to vector<64x48xf32>
    %18 = vector.extract_strided_slice %13 {offsets = [0, 48], sizes = [64, 48], strides = [1, 1]} : vector<64x144xf32> to vector<64x48xf32>
    %19 = vector.extract_strided_slice %13 {offsets = [0, 96], sizes = [64, 48], strides = [1, 1]} : vector<64x144xf32> to vector<64x48xf32>
    %cst_14 = arith.constant 0.000000e+00 : f32
    %20 = vector.broadcast %cst_14 : f32 to vector<64x48xf32>
    %21 = vector.extract_strided_slice %14 {offsets = [0, 0], sizes = [64, 16], strides = [1, 1]} : vector<64x48xf32> to vector<64x16xf32>
    %22 = vector.extract_strided_slice %18 {offsets = [0, 0], sizes = [64, 16], strides = [1, 1]} : vector<64x48xf32> to vector<64x16xf32>
    %cst_15 = arith.constant dense<0.000000e+00> : vector<64x64xf32>
    %23 = tpu.matmul %21, %22, %cst_15 {dimension_numbers = #tpu.dot_dimension_numbers<[1], [1], [0], [0], [0, 0, 1, 0], [], []>} : vector<64x16xf32>, vector<64x16xf32>, vector<64x64xf32> -> vector<64x64xf32>
    %cst_16 = arith.constant dense<0xFF800000> : vector<64xf32>
    %24 = vector.multi_reduction <maximumf>, %23, %cst_16 [1] : vector<64x64xf32> to vector<64xf32>
    %25 = vector.shape_cast %24 : vector<64xf32> to vector<64x1xf32>
    %26 = vector.broadcast %25 : vector<64x1xf32> to vector<64x64xf32>
    %27 = arith.subf %23, %26 : vector<64x64xf32>
    %28 = math.exp %27 : vector<64x64xf32>
    %cst_17 = arith.constant dense<0.000000e+00> : vector<64xf32>
    %29 = vector.multi_reduction <add>, %28, %cst_17 [1] : vector<64x64xf32> to vector<64xf32>
    %30 = vector.shape_cast %29 : vector<64xf32> to vector<64x1xf32>
    %31 = tpu.reciprocal %30 {approx = true} : vector<64x1xf32> -> vector<64x1xf32>
    %32 = vector.broadcast %31 : vector<64x1xf32> to vector<64x64xf32>
    %33 = arith.mulf %28, %32 : vector<64x64xf32>
    %34 = vector.extract_strided_slice %19 {offsets = [0, 0], sizes = [64, 16], strides = [1, 1]} : vector<64x48xf32> to vector<64x16xf32>
    %cst_18 = arith.constant dense<0.000000e+00> : vector<64x16xf32>
    %35 = tpu.matmul %33, %34, %cst_18 {dimension_numbers = #tpu.dot_dimension_numbers<[1], [0], [0], [1], [0, 0, 1, 1], [], []>} : vector<64x64xf32>, vector<64x16xf32>, vector<64x16xf32> -> vector<64x16xf32>
    %36 = vector.extract_strided_slice %17 {offsets = [0, 0], sizes = [64, 16], strides = [1, 1]} : vector<64x48xf32> to vector<64x16xf32>
    %37 = vector.extract_strided_slice %15 {offsets = [0, 0], sizes = [64, 16], strides = [1, 1]} : vector<64x48xf32> to vector<64x16xf32>
    %cst_19 = arith.constant dense<0.000000e+00> : vector<64x64xf32>
    %38 = tpu.matmul %36, %37, %cst_19 {dimension_numbers = #tpu.dot_dimension_numbers<[1], [1], [0], [0], [0, 0, 1, 0], [], []>} : vector<64x16xf32>, vector<64x16xf32>, vector<64x64xf32> -> vector<64x64xf32>
    %cst_20 = arith.constant dense<0xFF800000> : vector<64xf32>
    %39 = vector.multi_reduction <maximumf>, %38, %cst_20 [1] : vector<64x64xf32> to vector<64xf32>
    %40 = vector.shape_cast %39 : vector<64xf32> to vector<64x1xf32>
    %41 = vector.broadcast %40 : vector<64x1xf32> to vector<64x64xf32>
    %42 = arith.subf %38, %41 : vector<64x64xf32>
    %43 = math.exp %42 : vector<64x64xf32>
    %cst_21 = arith.constant dense<0.000000e+00> : vector<64xf32>
    %44 = vector.multi_reduction <add>, %43, %cst_21 [1] : vector<64x64xf32> to vector<64xf32>
    %45 = vector.shape_cast %44 : vector<64xf32> to vector<64x1xf32>
    %46 = tpu.reciprocal %45 {approx = true} : vector<64x1xf32> -> vector<64x1xf32>
    %47 = vector.broadcast %46 : vector<64x1xf32> to vector<64x64xf32>
    %48 = arith.mulf %43, %47 : vector<64x64xf32>
    %49 = vector.extract_strided_slice %16 {offsets = [0, 0], sizes = [64, 16], strides = [1, 1]} : vector<64x48xf32> to vector<64x16xf32>
    %cst_22 = arith.constant dense<0.000000e+00> : vector<64x16xf32>
    %50 = tpu.matmul %48, %49, %cst_22 {dimension_numbers = #tpu.dot_dimension_numbers<[1], [0], [0], [1], [0, 0, 1, 1], [], []>} : vector<64x64xf32>, vector<64x16xf32>, vector<64x16xf32> -> vector<64x16xf32>
    %c0_23 = arith.constant 0 : index
    %c0_24 = arith.constant 0 : index
    %c0_25 = arith.constant 0 : index
    %51 = vector.load %arg7[%c0_23, %c0_24, %c0_25] : memref<3x16x48xf32, #tpu.memory_space<vmem>>, vector<1x16x48xf32>
    %52 = vector.shape_cast %51 : vector<1x16x48xf32> to vector<16x48xf32>
    %cst_26 = arith.constant dense<0.000000e+00> : vector<64x48xf32>
    %53 = tpu.matmul %35, %52, %cst_26 {dimension_numbers = #tpu.dot_dimension_numbers<[1], [0], [0], [1], [0, 0, 1, 1], [], []>} : vector<64x16xf32>, vector<16x48xf32>, vector<64x48xf32> -> vector<64x48xf32>
    %54 = arith.addf %20, %53 : vector<64x48xf32>
    %c0_27 = arith.constant 0 : index
    %c0_28 = arith.constant 0 : index
    %c0_29 = arith.constant 0 : index
    %55 = vector.load %arg8[%c0_27, %c0_28, %c0_29] : memref<3x16x48xf32, #tpu.memory_space<vmem>>, vector<1x16x48xf32>
    %56 = vector.shape_cast %55 : vector<1x16x48xf32> to vector<16x48xf32>
    %cst_30 = arith.constant dense<0.000000e+00> : vector<64x48xf32>
    %57 = tpu.matmul %50, %56, %cst_30 {dimension_numbers = #tpu.dot_dimension_numbers<[1], [0], [0], [1], [0, 0, 1, 1], [], []>} : vector<64x16xf32>, vector<16x48xf32>, vector<64x48xf32> -> vector<64x48xf32>
    %58 = arith.addf %54, %57 : vector<64x48xf32>
    %59 = vector.extract_strided_slice %14 {offsets = [0, 16], sizes = [64, 16], strides = [1, 1]} : vector<64x48xf32> to vector<64x16xf32>
    %60 = vector.extract_strided_slice %18 {offsets = [0, 16], sizes = [64, 16], strides = [1, 1]} : vector<64x48xf32> to vector<64x16xf32>
    %cst_31 = arith.constant dense<0.000000e+00> : vector<64x64xf32>
    %61 = tpu.matmul %59, %60, %cst_31 {dimension_numbers = #tpu.dot_dimension_numbers<[1], [1], [0], [0], [0, 0, 1, 0], [], []>} : vector<64x16xf32>, vector<64x16xf32>, vector<64x64xf32> -> vector<64x64xf32>
    %cst_32 = arith.constant dense<0xFF800000> : vector<64xf32>
    %62 = vector.multi_reduction <maximumf>, %61, %cst_32 [1] : vector<64x64xf32> to vector<64xf32>
    %63 = vector.shape_cast %62 : vector<64xf32> to vector<64x1xf32>
    %64 = vector.broadcast %63 : vector<64x1xf32> to vector<64x64xf32>
    %65 = arith.subf %61, %64 : vector<64x64xf32>
    %66 = math.exp %65 : vector<64x64xf32>
    %cst_33 = arith.constant dense<0.000000e+00> : vector<64xf32>
    %67 = vector.multi_reduction <add>, %66, %cst_33 [1] : vector<64x64xf32> to vector<64xf32>
    %68 = vector.shape_cast %67 : vector<64xf32> to vector<64x1xf32>
    %69 = tpu.reciprocal %68 {approx = true} : vector<64x1xf32> -> vector<64x1xf32>
    %70 = vector.broadcast %69 : vector<64x1xf32> to vector<64x64xf32>
    %71 = arith.mulf %66, %70 : vector<64x64xf32>
    %72 = vector.extract_strided_slice %19 {offsets = [0, 16], sizes = [64, 16], strides = [1, 1]} : vector<64x48xf32> to vector<64x16xf32>
    %cst_34 = arith.constant dense<0.000000e+00> : vector<64x16xf32>
    %73 = tpu.matmul %71, %72, %cst_34 {dimension_numbers = #tpu.dot_dimension_numbers<[1], [0], [0], [1], [0, 0, 1, 1], [], []>} : vector<64x64xf32>, vector<64x16xf32>, vector<64x16xf32> -> vector<64x16xf32>
    %74 = vector.extract_strided_slice %17 {offsets = [0, 16], sizes = [64, 16], strides = [1, 1]} : vector<64x48xf32> to vector<64x16xf32>
    %75 = vector.extract_strided_slice %15 {offsets = [0, 16], sizes = [64, 16], strides = [1, 1]} : vector<64x48xf32> to vector<64x16xf32>
    %cst_35 = arith.constant dense<0.000000e+00> : vector<64x64xf32>
    %76 = tpu.matmul %74, %75, %cst_35 {dimension_numbers = #tpu.dot_dimension_numbers<[1], [1], [0], [0], [0, 0, 1, 0], [], []>} : vector<64x16xf32>, vector<64x16xf32>, vector<64x64xf32> -> vector<64x64xf32>
    %cst_36 = arith.constant dense<0xFF800000> : vector<64xf32>
    %77 = vector.multi_reduction <maximumf>, %76, %cst_36 [1] : vector<64x64xf32> to vector<64xf32>
    %78 = vector.shape_cast %77 : vector<64xf32> to vector<64x1xf32>
    %79 = vector.broadcast %78 : vector<64x1xf32> to vector<64x64xf32>
    %80 = arith.subf %76, %79 : vector<64x64xf32>
    %81 = math.exp %80 : vector<64x64xf32>
    %cst_37 = arith.constant dense<0.000000e+00> : vector<64xf32>
    %82 = vector.multi_reduction <add>, %81, %cst_37 [1] : vector<64x64xf32> to vector<64xf32>
    %83 = vector.shape_cast %82 : vector<64xf32> to vector<64x1xf32>
    %84 = tpu.reciprocal %83 {approx = true} : vector<64x1xf32> -> vector<64x1xf32>
    %85 = vector.broadcast %84 : vector<64x1xf32> to vector<64x64xf32>
    %86 = arith.mulf %81, %85 : vector<64x64xf32>
    %87 = vector.extract_strided_slice %16 {offsets = [0, 16], sizes = [64, 16], strides = [1, 1]} : vector<64x48xf32> to vector<64x16xf32>
    %cst_38 = arith.constant dense<0.000000e+00> : vector<64x16xf32>
    %88 = tpu.matmul %86, %87, %cst_38 {dimension_numbers = #tpu.dot_dimension_numbers<[1], [0], [0], [1], [0, 0, 1, 1], [], []>} : vector<64x64xf32>, vector<64x16xf32>, vector<64x16xf32> -> vector<64x16xf32>
    %c1 = arith.constant 1 : index
    %c0_39 = arith.constant 0 : index
    %c0_40 = arith.constant 0 : index
    %89 = vector.load %arg7[%c1, %c0_39, %c0_40] : memref<3x16x48xf32, #tpu.memory_space<vmem>>, vector<1x16x48xf32>
    %90 = vector.shape_cast %89 : vector<1x16x48xf32> to vector<16x48xf32>
    %cst_41 = arith.constant dense<0.000000e+00> : vector<64x48xf32>
    %91 = tpu.matmul %73, %90, %cst_41 {dimension_numbers = #tpu.dot_dimension_numbers<[1], [0], [0], [1], [0, 0, 1, 1], [], []>} : vector<64x16xf32>, vector<16x48xf32>, vector<64x48xf32> -> vector<64x48xf32>
    %92 = arith.addf %58, %91 : vector<64x48xf32>
    %c1_42 = arith.constant 1 : index
    %c0_43 = arith.constant 0 : index
    %c0_44 = arith.constant 0 : index
    %93 = vector.load %arg8[%c1_42, %c0_43, %c0_44] : memref<3x16x48xf32, #tpu.memory_space<vmem>>, vector<1x16x48xf32>
    %94 = vector.shape_cast %93 : vector<1x16x48xf32> to vector<16x48xf32>
    %cst_45 = arith.constant dense<0.000000e+00> : vector<64x48xf32>
    %95 = tpu.matmul %88, %94, %cst_45 {dimension_numbers = #tpu.dot_dimension_numbers<[1], [0], [0], [1], [0, 0, 1, 1], [], []>} : vector<64x16xf32>, vector<16x48xf32>, vector<64x48xf32> -> vector<64x48xf32>
    %96 = arith.addf %92, %95 : vector<64x48xf32>
    %97 = vector.extract_strided_slice %14 {offsets = [0, 32], sizes = [64, 16], strides = [1, 1]} : vector<64x48xf32> to vector<64x16xf32>
    %98 = vector.extract_strided_slice %18 {offsets = [0, 32], sizes = [64, 16], strides = [1, 1]} : vector<64x48xf32> to vector<64x16xf32>
    %cst_46 = arith.constant dense<0.000000e+00> : vector<64x64xf32>
    %99 = tpu.matmul %97, %98, %cst_46 {dimension_numbers = #tpu.dot_dimension_numbers<[1], [1], [0], [0], [0, 0, 1, 0], [], []>} : vector<64x16xf32>, vector<64x16xf32>, vector<64x64xf32> -> vector<64x64xf32>
    %cst_47 = arith.constant dense<0xFF800000> : vector<64xf32>
    %100 = vector.multi_reduction <maximumf>, %99, %cst_47 [1] : vector<64x64xf32> to vector<64xf32>
    %101 = vector.shape_cast %100 : vector<64xf32> to vector<64x1xf32>
    %102 = vector.broadcast %101 : vector<64x1xf32> to vector<64x64xf32>
    %103 = arith.subf %99, %102 : vector<64x64xf32>
    %104 = math.exp %103 : vector<64x64xf32>
    %cst_48 = arith.constant dense<0.000000e+00> : vector<64xf32>
    %105 = vector.multi_reduction <add>, %104, %cst_48 [1] : vector<64x64xf32> to vector<64xf32>
    %106 = vector.shape_cast %105 : vector<64xf32> to vector<64x1xf32>
    %107 = tpu.reciprocal %106 {approx = true} : vector<64x1xf32> -> vector<64x1xf32>
    %108 = vector.broadcast %107 : vector<64x1xf32> to vector<64x64xf32>
    %109 = arith.mulf %104, %108 : vector<64x64xf32>
    %110 = vector.extract_strided_slice %19 {offsets = [0, 32], sizes = [64, 16], strides = [1, 1]} : vector<64x48xf32> to vector<64x16xf32>
    %cst_49 = arith.constant dense<0.000000e+00> : vector<64x16xf32>
    %111 = tpu.matmul %109, %110, %cst_49 {dimension_numbers = #tpu.dot_dimension_numbers<[1], [0], [0], [1], [0, 0, 1, 1], [], []>} : vector<64x64xf32>, vector<64x16xf32>, vector<64x16xf32> -> vector<64x16xf32>
    %112 = vector.extract_strided_slice %17 {offsets = [0, 32], sizes = [64, 16], strides = [1, 1]} : vector<64x48xf32> to vector<64x16xf32>
    %113 = vector.extract_strided_slice %15 {offsets = [0, 32], sizes = [64, 16], strides = [1, 1]} : vector<64x48xf32> to vector<64x16xf32>
    %cst_50 = arith.constant dense<0.000000e+00> : vector<64x64xf32>
    %114 = tpu.matmul %112, %113, %cst_50 {dimension_numbers = #tpu.dot_dimension_numbers<[1], [1], [0], [0], [0, 0, 1, 0], [], []>} : vector<64x16xf32>, vector<64x16xf32>, vector<64x64xf32> -> vector<64x64xf32>
    %cst_51 = arith.constant dense<0xFF800000> : vector<64xf32>
    %115 = vector.multi_reduction <maximumf>, %114, %cst_51 [1] : vector<64x64xf32> to vector<64xf32>
    %116 = vector.shape_cast %115 : vector<64xf32> to vector<64x1xf32>
    %117 = vector.broadcast %116 : vector<64x1xf32> to vector<64x64xf32>
    %118 = arith.subf %114, %117 : vector<64x64xf32>
    %119 = math.exp %118 : vector<64x64xf32>
    %cst_52 = arith.constant dense<0.000000e+00> : vector<64xf32>
    %120 = vector.multi_reduction <add>, %119, %cst_52 [1] : vector<64x64xf32> to vector<64xf32>
    %121 = vector.shape_cast %120 : vector<64xf32> to vector<64x1xf32>
    %122 = tpu.reciprocal %121 {approx = true} : vector<64x1xf32> -> vector<64x1xf32>
    %123 = vector.broadcast %122 : vector<64x1xf32> to vector<64x64xf32>
    %124 = arith.mulf %119, %123 : vector<64x64xf32>
    %125 = vector.extract_strided_slice %16 {offsets = [0, 32], sizes = [64, 16], strides = [1, 1]} : vector<64x48xf32> to vector<64x16xf32>
    %cst_53 = arith.constant dense<0.000000e+00> : vector<64x16xf32>
    %126 = tpu.matmul %124, %125, %cst_53 {dimension_numbers = #tpu.dot_dimension_numbers<[1], [0], [0], [1], [0, 0, 1, 1], [], []>} : vector<64x64xf32>, vector<64x16xf32>, vector<64x16xf32> -> vector<64x16xf32>
    %c2 = arith.constant 2 : index
    %c0_54 = arith.constant 0 : index
    %c0_55 = arith.constant 0 : index
    %127 = vector.load %arg7[%c2, %c0_54, %c0_55] : memref<3x16x48xf32, #tpu.memory_space<vmem>>, vector<1x16x48xf32>
    %128 = vector.shape_cast %127 : vector<1x16x48xf32> to vector<16x48xf32>
    %cst_56 = arith.constant dense<0.000000e+00> : vector<64x48xf32>
    %129 = tpu.matmul %111, %128, %cst_56 {dimension_numbers = #tpu.dot_dimension_numbers<[1], [0], [0], [1], [0, 0, 1, 1], [], []>} : vector<64x16xf32>, vector<16x48xf32>, vector<64x48xf32> -> vector<64x48xf32>
    %130 = arith.addf %96, %129 : vector<64x48xf32>
    %c2_57 = arith.constant 2 : index
    %c0_58 = arith.constant 0 : index
    %c0_59 = arith.constant 0 : index
    %131 = vector.load %arg8[%c2_57, %c0_58, %c0_59] : memref<3x16x48xf32, #tpu.memory_space<vmem>>, vector<1x16x48xf32>
    %132 = vector.shape_cast %131 : vector<1x16x48xf32> to vector<16x48xf32>
    %cst_60 = arith.constant dense<0.000000e+00> : vector<64x48xf32>
    %133 = tpu.matmul %126, %132, %cst_60 {dimension_numbers = #tpu.dot_dimension_numbers<[1], [0], [0], [1], [0, 0, 1, 1], [], []>} : vector<64x16xf32>, vector<16x48xf32>, vector<64x48xf32> -> vector<64x48xf32>
    %134 = arith.addf %130, %133 : vector<64x48xf32>
    %c0_61 = arith.constant 0 : index
    %c0_62 = arith.constant 0 : index
    %135 = vector.load %arg9[%c0_61, %c0_62] : memref<1x48xf32, #tpu.memory_space<vmem>>, vector<1x48xf32>
    %136 = vector.broadcast %135 : vector<1x48xf32> to vector<64x48xf32>
    %137 = arith.addf %134, %136 : vector<64x48xf32>
    %cst_63 = arith.constant 0.000000e+00 : f32
    %138 = vector.broadcast %cst_63 : f32 to vector<64x48xf32>
    %139 = arith.maximumf %137, %138 : vector<64x48xf32>
    %140 = tpu.transpose %139, [1, 0] : vector<64x48xf32> -> vector<48x64xf32>
    %c0_64 = arith.constant 0 : index
    %c0_65 = arith.constant 0 : index
    %c0_66 = arith.constant 0 : index
    %141 = vector.load %arg10[%c0_64, %c0_65, %c0_66] : memref<1x48x64xf32, #tpu.memory_space<vmem>>, vector<1x48x64xf32>
    %142 = vector.shape_cast %141 : vector<1x48x64xf32> to vector<48x64xf32>
    %143 = vector.shape_cast %140 : vector<48x64xf32> to vector<1x48x64xf32>
    tpu.vector_store %arg10[%c0_64, %c0_65, %c0_66], %143 {strides = array<i32>} : memref<1x48x64xf32, #tpu.memory_space<vmem>>, vector<1x48x64xf32>,
    return
  }
  func.func @transform_0(%arg0: i32) -> (i32, i32, i32) {
    %c0_i32 = arith.constant 0 : i32
    %c0_i32_0 = arith.constant 0 : i32
    %c0_i32_1 = arith.constant 0 : i32
    return %arg0, %c0_i32, %c0_i32_0 : i32, i32, i32
  }
  func.func @transform_1(%arg0: i32) -> (i32, i32, i32) {
    %c0_i32 = arith.constant 0 : i32
    %c0_i32_0 = arith.constant 0 : i32
    %c0_i32_1 = arith.constant 0 : i32
    return %arg0, %c0_i32, %c0_i32_0 : i32, i32, i32
  }
  func.func @transform_2(%arg0: i32) -> (i32, i32) {
    %c0_i32 = arith.constant 0 : i32
    %c0_i32_0 = arith.constant 0 : i32
    %c0_i32_1 = arith.constant 0 : i32
    return %c0_i32, %c0_i32_0 : i32, i32
  }
  func.func @transform_3(%arg0: i32) -> (i32, i32) {
    %c0_i32 = arith.constant 0 : i32
    %c0_i32_0 = arith.constant 0 : i32
    %c0_i32_1 = arith.constant 0 : i32
    return %c0_i32, %c0_i32_0 : i32, i32
  }
  func.func @transform_4(%arg0: i32) -> (i32, i32) {
    %c0_i32 = arith.constant 0 : i32
    %c0_i32_0 = arith.constant 0 : i32
    %c0_i32_1 = arith.constant 0 : i32
    return %c0_i32, %c0_i32_0 : i32, i32
  }
  func.func @transform_5(%arg0: i32) -> (i32, i32) {
    %c0_i32 = arith.constant 0 : i32
    %c0_i32_0 = arith.constant 0 : i32
    %c0_i32_1 = arith.constant 0 : i32
    return %c0_i32, %c0_i32_0 : i32, i32
  }
  func.func @transform_6(%arg0: i32) -> (i32, i32, i32) {
    %c0_i32 = arith.constant 0 : i32
    %c0_i32_0 = arith.constant 0 : i32
    %c0_i32_1 = arith.constant 0 : i32
    %c0_i32_2 = arith.constant 0 : i32
    return %c0_i32, %c0_i32_0, %c0_i32_1 : i32, i32, i32
  }
  func.func @transform_7(%arg0: i32) -> (i32, i32, i32) {
    %c0_i32 = arith.constant 0 : i32
    %c0_i32_0 = arith.constant 0 : i32
    %c0_i32_1 = arith.constant 0 : i32
    %c0_i32_2 = arith.constant 0 : i32
    return %c0_i32, %c0_i32_0, %c0_i32_1 : i32, i32, i32
  }
  func.func @transform_8(%arg0: i32) -> (i32, i32) {
    %c0_i32 = arith.constant 0 : i32
    %c0_i32_0 = arith.constant 0 : i32
    %c0_i32_1 = arith.constant 0 : i32
    return %c0_i32, %c0_i32_0 : i32, i32
  }
  func.func @transform_9(%arg0: i32) -> (i32, i32, i32) {
    %c0_i32 = arith.constant 0 : i32
    %c0_i32_0 = arith.constant 0 : i32
    %c0_i32_1 = arith.constant 0 : i32
    return %arg0, %c0_i32, %c0_i32_0 : i32, i32, i32
  }
}

</mosaic_0001>

<llo_original>
// kernel: tpu_custom_call.1
$region0: #{tpu_custom_call.1}
  #allocation0 [shape = 'u32[]', space=smem, size = 0x4, offset = 0x4, fixed_abs, tag = 'smem constant byte address 0x4 - core index']
  #allocation1 [shape = 'u32[72,128]{1,0:T(1,128)}', space=vmem, size = 0x9000, scoped, tag = 'internal scratch']
  %s0 = inlined_call_operand.vmem [shape: f32[2,64,64], index: 0, kind: input, shape index: {}]
  %s1 = inlined_call_operand.vmem [shape: f32[2,64,48], index: 1, kind: input, shape index: {}]
  %s2 = inlined_call_operand.hbm [shape: f32[64,144], index: 2, kind: input, shape index: {}]
  %s3 = inlined_call_operand.vmem [shape: f32[1,144], index: 3, kind: input, shape index: {}]
  %s4 = inlined_call_operand.vmem [shape: f32[48,144], index: 4, kind: input, shape index: {}]
  %s5 = inlined_call_operand.hbm [shape: f32[1,144], index: 5, kind: input, shape index: {}]
  %s6 = inlined_call_operand.hbm [shape: f32[3,16,48], index: 6, kind: input, shape index: {}]
  %s7 = inlined_call_operand.hbm [shape: f32[3,16,48], index: 7, kind: input, shape index: {}]
  %s8 = inlined_call_operand.vmem [shape: f32[1,48], index: 8, kind: input, shape index: {}]
  %s9 = inlined_call_operand.hbm [shape: f32[2,48,64], index: 9, kind: output, shape index: {}]
  %s10 = sld [smem:[#allocation0]]
  $region85: #{tpu_custom_call.1} parent=0
    _
  %s12 = ssub.s32 1, %s10
  %s13 = scalar_select 0, %s12, %s10
  $region1: #{tpu_custom_call.1} parent=0
    #allocation2 [shape = 'u8[65536]{0}', space=vmem, size = 0x10000, scoped, tag = 'input window, operand 2, single buffered']
    #allocation3 [shape = 's32[2]{0}', space=sflag, size = 0x8, scoped, tag = 'scoped memory for tpu_custom_call.1']
    #allocation4 [shape = 's32[2]{0}', space=sflag, size = 0x8, scoped, tag = 'scoped memory for tpu_custom_call.1']
    #allocation5 [shape = 'u8[1024]{0}', space=vmem, size = 0x400, scoped, tag = 'input window, operand 5, single buffered']
    #allocation6 [shape = 's32[1]{0}', space=sflag, size = 0x4, scoped, tag = 'scoped memory for tpu_custom_call.1']
    #allocation7 [shape = 'u8[24576]{0}', space=vmem, size = 0x6000, scoped, tag = 'input window, operand 6, single buffered']
    #allocation8 [shape = 'u8[24576]{0}', space=vmem, size = 0x6000, scoped, tag = 'input window, operand 7, single buffered']
    #allocation9 [shape = 's32[1]{0}', space=sflag, size = 0x4, scoped, tag = 'scoped memory for tpu_custom_call.1']
    #allocation10 [shape = 'u8[49152]{0}', space=vmem, size = 0xc000, scoped, tag = 'output window, operand 0']
    %14 = vsyncpa [#allocation3], 0
    %15 = vsyncpa [#allocation6], 0
    %16 = vsyncpa [#allocation9], 0
    %17 = vsyncpa [#allocation4], 0
    %s18 = scalar_lea.sflag [#allocation4], 1
    %19 = vsyncpa %s18, 0
    loop: start=0, step=1, limit=4
    $region2: #{tpu_custom_call.1} parent=1 // loop_pre_header
      _
    $region3: #{tpu_custom_call.1} parent=1 // loop_header
      %s21 = sphi 0, %s25
      %p22 = scmp.ge.s32.totalorder %s21, 4
      %s31 = sphi 0, %s33
      %s34 = sphi 0, %s31
      %s35 = sphi 0, %s34
      %s51 = sphi 0, %s35
      %s57 = sphi 0, %s59
      %s60 = sphi 0, %s57
      %s61 = sphi 0, %s60
      %s77 = sphi 0, %s61
      %s81 = sphi 0, %s81
      %s83 = sphi 0, %s81
      %s84 = sphi 0, %s83
      %s98 = sphi 0, %s84
      %s102 = sphi 0, %s102
      %s104 = sphi 0, %s102
      %s105 = sphi 0, %s104
      %s119 = sphi 0, %s105
      %s123 = sphi 0, %s123
      %s125 = sphi 0, %s123
      %s126 = sphi 0, %s125
      %s140 = sphi 0, %s126
      %s144 = sphi 0, %s144
      %s146 = sphi 0, %s144
      %s147 = sphi 0, %s146
      %s161 = sphi 0, %s147
      %s165 = sphi 0, %s165
      %s167 = sphi 0, %s165
      %s168 = sphi 0, %s167
      %s182 = sphi 0, %s168
      %s186 = sphi 0, %s186
      %s188 = sphi 0, %s186
      %s189 = sphi 0, %s188
      %s203 = sphi 0, %s189
      %s207 = sphi 0, %s207
      %s209 = sphi 0, %s207
      %s210 = sphi 0, %s209
      %s224 = sphi 0, %s210
      %s230 = sphi 0, %s232
      %s233 = sphi 0, %s230
      %s234 = sphi 0, %s233
      %s250 = sphi 0, %s234
    $region4: #{tpu_custom_call.1} parent=1 // loop_header_branch
      %24 = sbr.rel (%p22) target = $region8
    $region5: #{tpu_custom_call.1} parent=1 // loop_body
      %s26 = ssub.s32 %s21, 1
      %s27 = ssub.s32 %s21, 2
      %s28 = sadd.s32 %s21, 1
      %s29 = ssub.s32 %s21, %s28
      %p30 = scmp.eq.s32.totalorder %s29, 0
      %s32 = sadd.s32 %s31, 1
      %s33 = scalar_select %p30, %s31, %s32
      %p36 = pneg %p30
      %p37 = scmp.eq.s32.totalorder %s21, 1
      %p38 = por %p36, %p37
      %p39 = scmp.ne.s32.totalorder %s31, %s34
      %p40 = scmp.eq.s32.totalorder %s21, 0
      %p41 = por %p39, %p40
      %p42 = scmp.ne.s32.totalorder %s31, %s34
      %p43 = scmp.eq.s32.totalorder %s26, 1
      %p44 = por %p42, %p43
      %p45 = scmp.ne.s32.totalorder %s34, %s35
      %p46 = scmp.eq.s32.totalorder %s26, 0
      %p47 = por %p45, %p46
      %p48 = scmp.ne.s32.totalorder %s34, %s35
      %p49 = scmp.eq.s32.totalorder %s27, 1
      %p50 = por %p48, %p49
      %p52 = scmp.ne.s32.totalorder %s35, %s51
      %p53 = scmp.eq.s32.totalorder %s27, 0
      %p54 = por %p52, %p53
      %s55 = ssub.s32 %s21, %s28
      %p56 = scmp.eq.s32.totalorder %s55, 0
      %s58 = sadd.s32 %s57, 1
      %s59 = scalar_select %p56, %s57, %s58
      %p62 = pneg %p56
      %p63 = scmp.eq.s32.totalorder %s21, 1
      %p64 = por %p62, %p63
      %p65 = scmp.ne.s32.totalorder %s57, %s60
      %p66 = scmp.eq.s32.totalorder %s21, 0
      %p67 = por %p65, %p66
      %p68 = scmp.ne.s32.totalorder %s57, %s60
      %p69 = scmp.eq.s32.totalorder %s26, 1
      %p70 = por %p68, %p69
      %p71 = scmp.ne.s32.totalorder %s60, %s61
      %p72 = scmp.eq.s32.totalorder %s26, 0
      %p73 = por %p71, %p72
      %p74 = scmp.ne.s32.totalorder %s60, %s61
      %p75 = scmp.eq.s32.totalorder %s27, 1
      %p76 = por %p74, %p75
      %p78 = scmp.ne.s32.totalorder %s61, %s77
      %p79 = scmp.eq.s32.totalorder %s27, 0
      %p80 = por %p78, %p79
      %s82 = sadd.s32 %s81, 1
      %p85 = scmp.eq.s32.totalorder %s21, 1
      %p86 = scmp.ne.s32.totalorder %s81, %s83
      %p87 = scmp.eq.s32.totalorder %s21, 0
      %p88 = por %p86, %p87
      %p89 = scmp.ne.s32.totalorder %s81, %s83
      %p90 = scmp.eq.s32.totalorder %s26, 1
      %p91 = por %p89, %p90
      %p92 = scmp.ne.s32.totalorder %s83, %s84
      %p93 = scmp.eq.s32.totalorder %s26, 0
      %p94 = por %p92, %p93
      %p95 = scmp.ne.s32.totalorder %s83, %s84
      %p96 = scmp.eq.s32.totalorder %s27, 1
      %p97 = por %p95, %p96
      %p99 = scmp.ne.s32.totalorder %s84, %s98
      %p100 = scmp.eq.s32.totalorder %s27, 0
      %p101 = por %p99, %p100
      %s103 = sadd.s32 %s102, 1
      %p106 = scmp.eq.s32.totalorder %s21, 1
      %p107 = scmp.ne.s32.totalorder %s102, %s104
      %p108 = scmp.eq.s32.totalorder %s21, 0
      %p109 = por %p107, %p108
      %p110 = scmp.ne.s32.totalorder %s102, %s104
      %p111 = scmp.eq.s32.totalorder %s26, 1
      %p112 = por %p110, %p111
      %p113 = scmp.ne.s32.totalorder %s104, %s105
      %p114 = scmp.eq.s32.totalorder %s26, 0
      %p115 = por %p113, %p114
      %p116 = scmp.ne.s32.totalorder %s104, %s105
      %p117 = scmp.eq.s32.totalorder %s27, 1
      %p118 = por %p116, %p117
      %p120 = scmp.ne.s32.totalorder %s105, %s119
      %p121 = scmp.eq.s32.totalorder %s27, 0
      %p122 = por %p120, %p121
      %s124 = sadd.s32 %s123, 1
      %p127 = scmp.eq.s32.totalorder %s21, 1
      %p128 = scmp.ne.s32.totalorder %s123, %s125
      %p129 = scmp.eq.s32.totalorder %s21, 0
      %p130 = por %p128, %p129
      %p131 = scmp.ne.s32.totalorder %s123, %s125
      %p132 = scmp.eq.s32.totalorder %s26, 1
      %p133 = por %p131, %p132
      %p134 = scmp.ne.s32.totalorder %s125, %s126
      %p135 = scmp.eq.s32.totalorder %s26, 0
      %p136 = por %p134, %p135
      %p137 = scmp.ne.s32.totalorder %s125, %s126
      %p138 = scmp.eq.s32.totalorder %s27, 1
      %p139 = por %p137, %p138
      %p141 = scmp.ne.s32.totalorder %s126, %s140
      %p142 = scmp.eq.s32.totalorder %s27, 0
      %p143 = por %p141, %p142
      %s145 = sadd.s32 %s144, 1
      %p148 = scmp.eq.s32.totalorder %s21, 1
      %p149 = scmp.ne.s32.totalorder %s144, %s146
      %p150 = scmp.eq.s32.totalorder %s21, 0
      %p151 = por %p149, %p150
      %p152 = scmp.ne.s32.totalorder %s144, %s146
      %p153 = scmp.eq.s32.totalorder %s26, 1
      %p154 = por %p152, %p153
      %p155 = scmp.ne.s32.totalorder %s146, %s147
      %p156 = scmp.eq.s32.totalorder %s26, 0
      %p157 = por %p155, %p156
      %p158 = scmp.ne.s32.totalorder %s146, %s147
      %p159 = scmp.eq.s32.totalorder %s27, 1
      %p160 = por %p158, %p159
      %p162 = scmp.ne.s32.totalorder %s147, %s161
      %p163 = scmp.eq.s32.totalorder %s27, 0
      %p164 = por %p162, %p163
      %s166 = sadd.s32 %s165, 1
      %p169 = scmp.eq.s32.totalorder %s21, 1
      %p170 = scmp.ne.s32.totalorder %s165, %s167
      %p171 = scmp.eq.s32.totalorder %s21, 0
      %p172 = por %p170, %p171
      %p173 = scmp.ne.s32.totalorder %s165, %s167
      %p174 = scmp.eq.s32.totalorder %s26, 1
      %p175 = por %p173, %p174
      %p176 = scmp.ne.s32.totalorder %s167, %s168
      %p177 = scmp.eq.s32.totalorder %s26, 0
      %p178 = por %p176, %p177
      %p179 = scmp.ne.s32.totalorder %s167, %s168
      %p180 = scmp.eq.s32.totalorder %s27, 1
      %p181 = por %p179, %p180
      %p183 = scmp.ne.s32.totalorder %s168, %s182
      %p184 = scmp.eq.s32.totalorder %s27, 0
      %p185 = por %p183, %p184
      %s187 = sadd.s32 %s186, 1
      %p190 = scmp.eq.s32.totalorder %s21, 1
      %p191 = scmp.ne.s32.totalorder %s186, %s188
      %p192 = scmp.eq.s32.totalorder %s21, 0
      %p193 = por %p191, %p192
      %p194 = scmp.ne.s32.totalorder %s186, %s188
      %p195 = scmp.eq.s32.totalorder %s26, 1
      %p196 = por %p194, %p195
      %p197 = scmp.ne.s32.totalorder %s188, %s189
      %p198 = scmp.eq.s32.totalorder %s26, 0
      %p199 = por %p197, %p198
      %p200 = scmp.ne.s32.totalorder %s188, %s189
      %p201 = scmp.eq.s32.totalorder %s27, 1
      %p202 = por %p200, %p201
      %p204 = scmp.ne.s32.totalorder %s189, %s203
      %p205 = scmp.eq.s32.totalorder %s27, 0
      %p206 = por %p204, %p205
      %s208 = sadd.s32 %s207, 1
      %p211 = scmp.eq.s32.totalorder %s21, 1
      %p212 = scmp.ne.s32.totalorder %s207, %s209
      %p213 = scmp.eq.s32.totalorder %s21, 0
      %p214 = por %p212, %p213
      %p215 = scmp.ne.s32.totalorder %s207, %s209
      %p216 = scmp.eq.s32.totalorder %s26, 1
      %p217 = por %p215, %p216
      %p218 = scmp.ne.s32.totalorder %s209, %s210
      %p219 = scmp.eq.s32.totalorder %s26, 0
      %p220 = por %p218, %p219
      %p221 = scmp.ne.s32.totalorder %s209, %s210
      %p222 = scmp.eq.s32.totalorder %s27, 1
      %p223 = por %p221, %p222
      %p225 = scmp.ne.s32.totalorder %s210, %s224
      %p226 = scmp.eq.s32.totalorder %s27, 0
      %p227 = por %p225, %p226
      %s228 = ssub.s32 %s21, %s28
      %p229 = scmp.eq.s32.totalorder %s228, 0
      %s231 = sadd.s32 %s230, 1
      %s232 = scalar_select %p229, %s230, %s231
      %p235 = pneg %p229
      %p236 = scmp.eq.s32.totalorder %s21, 1
      %p237 = por %p235, %p236
      %p238 = scmp.ne.s32.totalorder %s230, %s233
      %p239 = scmp.eq.s32.totalorder %s21, 0
      %p240 = por %p238, %p239
      %p241 = scmp.ne.s32.totalorder %s230, %s233
      %p242 = scmp.eq.s32.totalorder %s26, 1
      %p243 = por %p241, %p242
      %p244 = scmp.ne.s32.totalorder %s233, %s234
      %p245 = scmp.eq.s32.totalorder %s26, 0
      %p246 = por %p244, %p245
      %p247 = scmp.ne.s32.totalorder %s233, %s234
      %p248 = scmp.eq.s32.totalorder %s27, 1
      %p249 = por %p247, %p248
      %p251 = scmp.ne.s32.totalorder %s234, %s250
      %p252 = scmp.eq.s32.totalorder %s27, 0
      %p253 = por %p251, %p252
      %p254 = scmp.le.s32.totalorder 1, %s21
      %p255 = scmp.lt.s32.totalorder %s21, 3
      %p256 = pnand %p254, %p255
      %p257 = pneg %p256
      // Predicated region
      $region9: #{tpu_custom_call.1} parent=5 // pred_check
        _
      $region10: #{tpu_custom_call.1} parent=5 // pred_check_branch
        %259 = sbr.rel (%p256) target = $region12
      $region11: #{tpu_custom_call.1} parent=5 // pred_region
        %s260 = ssub.s32 %s21, 1
        // Predicated region
        $region13: #{tpu_custom_call.1} parent=11 // pred_check
          %p261 = pneg %p94
        $region14: #{tpu_custom_call.1} parent=11 // pred_check_branch
          %263 = sbr.rel (%p261) target = $region16
        $region15: #{tpu_custom_call.1} parent=11 // pred_region
          %265 = vsyncadd [#allocation3], 0
          %s266 = sshll.u32 %s2, 4
          %s267 = int_to_ptr.hbm [resolvable:$true] %s266
          %s268 = sshll.u32 [#allocation2], 4
          %s269 = int_to_ptr.vmem [resolvable:$true] %s268
          %274 = dma.hbm_to_vmem [thread:$0]  %s267, 2048, %s269, [#allocation3], 256, 256, 16
        $region16: #{tpu_custom_call.1} parent=11 // pred_fallthru
          _
        // Predicated region
        $region17: #{tpu_custom_call.1} parent=11 // pred_check
          %p275 = pneg %p115
        $region18: #{tpu_custom_call.1} parent=11 // pred_check_branch
          %277 = sbr.rel (%p275) target = $region20
        $region19: #{tpu_custom_call.1} parent=11 // pred_region
          _
        $region20: #{tpu_custom_call.1} parent=11 // pred_fallthru
          _
        // Predicated region
        $region21: #{tpu_custom_call.1} parent=11 // pred_check
          %p278 = pneg %p136
        $region22: #{tpu_custom_call.1} parent=11 // pred_check_branch
          %280 = sbr.rel (%p278) target = $region24
        $region23: #{tpu_custom_call.1} parent=11 // pred_region
          _
        $region24: #{tpu_custom_call.1} parent=11 // pred_fallthru
          _
        // Predicated region
        $region25: #{tpu_custom_call.1} parent=11 // pred_check
          %p281 = pneg %p157
        $region26: #{tpu_custom_call.1} parent=11 // pred_check_branch
          %283 = sbr.rel (%p281) target = $region28
        $region27: #{tpu_custom_call.1} parent=11 // pred_region
          %285 = vsyncadd [#allocation6], 0
          %s287 = sshll.u32 %s5, 4
          %s288 = int_to_ptr.hbm [resolvable:$true] %s287
          %s289 = sshll.u32 [#allocation5], 4
          %s290 = int_to_ptr.vmem [resolvable:$true] %s289
          %292 = dma.hbm_to_vmem [thread:$0]  %s288, 32, %s290, [#allocation6]
        $region28: #{tpu_custom_call.1} parent=11 // pred_fallthru
          _
        // Predicated region
        $region29: #{tpu_custom_call.1} parent=11 // pred_check
          %p293 = pneg %p178
        $region30: #{tpu_custom_call.1} parent=11 // pred_check_branch
          %295 = sbr.rel (%p293) target = $region32
        $region31: #{tpu_custom_call.1} parent=11 // pred_region
          %297 = vsyncadd [#allocation6], 0
          %s298 = sshll.u32 %s6, 4
          %s299 = int_to_ptr.hbm [resolvable:$true] %s298
          %s300 = sshll.u32 [#allocation7], 4
          %s301 = int_to_ptr.vmem [resolvable:$true] %s300
          %306 = dma.hbm_to_vmem [thread:$0]  %s299, 768, %s301, [#allocation6], 128, 128, 8
        $region32: #{tpu_custom_call.1} parent=11 // pred_fallthru
          _
        // Predicated region
        $region33: #{tpu_custom_call.1} parent=11 // pred_check
          %p307 = pneg %p199
        $region34: #{tpu_custom_call.1} parent=11 // pred_check_branch
          %309 = sbr.rel (%p307) target = $region36
        $region35: #{tpu_custom_call.1} parent=11 // pred_region
          %311 = vsyncadd [#allocation9], 0
          %s312 = sshll.u32 %s7, 4
          %s313 = int_to_ptr.hbm [resolvable:$true] %s312
          %s314 = sshll.u32 [#allocation8], 4
          %s315 = int_to_ptr.vmem [resolvable:$true] %s314
          %320 = dma.hbm_to_vmem [thread:$0]  %s313, 768, %s315, [#allocation9], 128, 128, 8
        $region36: #{tpu_custom_call.1} parent=11 // pred_fallthru
          _
        // Predicated region
        $region37: #{tpu_custom_call.1} parent=11 // pred_check
          %p321 = pneg %p220
        $region38: #{tpu_custom_call.1} parent=11 // pred_check_branch
          %323 = sbr.rel (%p321) target = $region40
        $region39: #{tpu_custom_call.1} parent=11 // pred_region
          _
        $region40: #{tpu_custom_call.1} parent=11 // pred_fallthru
          _
      $region12: #{tpu_custom_call.1} parent=5 // pred_fallthru
        _
      %p324 = scmp.lt.s32.totalorder %s21, 2
      // Predicated region
      $region41: #{tpu_custom_call.1} parent=5 // pred_check
        %p325 = pneg %p324
      $region42: #{tpu_custom_call.1} parent=5 // pred_check_branch
        %327 = sbr.rel (%p325) target = $region44
      $region43: #{tpu_custom_call.1} parent=5 // pred_region
        // Predicated region
        $region45: #{tpu_custom_call.1} parent=43 // pred_check
          %p328 = pneg %p41
        $region46: #{tpu_custom_call.1} parent=43 // pred_check_branch
          %330 = sbr.rel (%p328) target = $region48
        $region47: #{tpu_custom_call.1} parent=43 // pred_region
          %p331 = scmp.lt.s32.totalorder %s21, 1
          %s332 = scalar_select %p331, %s21, 1
          %s333 = smul.addr %s332, 8
          %s334 = smul.addr %s333, 8
          %s335 = scalar_lea.vmem %s0, %s334
        $region48: #{tpu_custom_call.1} parent=43 // pred_fallthru
          _
        // Predicated region
        $region49: #{tpu_custom_call.1} parent=43 // pred_check
          %p336 = pneg %p67
        $region50: #{tpu_custom_call.1} parent=43 // pred_check_branch
          %338 = sbr.rel (%p336) target = $region52
        $region51: #{tpu_custom_call.1} parent=43 // pred_region
          %p339 = scmp.lt.s32.totalorder %s21, 1
          %s340 = scalar_select %p339, %s21, 1
          %s341 = smul.addr %s340, 8
          %s342 = smul.addr %s341, 8
          %s343 = scalar_lea.vmem %s1, %s342
        $region52: #{tpu_custom_call.1} parent=43 // pred_fallthru
          _
      $region44: #{tpu_custom_call.1} parent=5 // pred_fallthru
        _
      %p344 = scmp.le.s32.totalorder 1, %s21
      %p345 = scmp.lt.s32.totalorder %s21, 3
      %p346 = pnand %p344, %p345
      %p347 = pneg %p346
      // Predicated region
      $region53: #{tpu_custom_call.1} parent=5 // pred_check
        _
      $region54: #{tpu_custom_call.1} parent=5 // pred_check_branch
        %349 = sbr.rel (%p346) target = $region56
      $region55: #{tpu_custom_call.1} parent=5 // pred_region
        %s350 = ssub.s32 %s21, 1
        // Predicated region
        $region57: #{tpu_custom_call.1} parent=55 // pred_check
          %p351 = pneg %p94
        $region58: #{tpu_custom_call.1} parent=55 // pred_check_branch
          %353 = sbr.rel (%p351) target = $region60
        $region59: #{tpu_custom_call.1} parent=55 // pred_region
          %355 = dma.done [#allocation3], 2048
        $region60: #{tpu_custom_call.1} parent=55 // pred_fallthru
          _
        // Predicated region
        $region61: #{tpu_custom_call.1} parent=55 // pred_check
          %p356 = pneg %p157
        $region62: #{tpu_custom_call.1} parent=55 // pred_check_branch
          %358 = sbr.rel (%p356) target = $region64
        $region63: #{tpu_custom_call.1} parent=55 // pred_region
          %360 = dma.done [#allocation6], 32
        $region64: #{tpu_custom_call.1} parent=55 // pred_fallthru
          _
        // Predicated region
        $region65: #{tpu_custom_call.1} parent=55 // pred_check
          %p361 = pneg %p178
        $region66: #{tpu_custom_call.1} parent=55 // pred_check_branch
          %363 = sbr.rel (%p361) target = $region68
        $region67: #{tpu_custom_call.1} parent=55 // pred_region
          %365 = dma.done [#allocation6], 768
        $region68: #{tpu_custom_call.1} parent=55 // pred_fallthru
          _
        // Predicated region
        $region69: #{tpu_custom_call.1} parent=55 // pred_check
          %p366 = pneg %p199
        $region70: #{tpu_custom_call.1} parent=55 // pred_check_branch
          %368 = sbr.rel (%p366) target = $region72
        $region71: #{tpu_custom_call.1} parent=55 // pred_region
          %370 = dma.done [#allocation9], 768
        $region72: #{tpu_custom_call.1} parent=55 // pred_fallthru
          _
        %p371 = scmp.lt.s32.totalorder %s26, 1
        %s372 = scalar_select %p371, %s26, 1
        %s373 = smul.addr %s372, 8
        %s374 = smul.addr %s373, 8
        %s375 = scalar_lea.vmem %s0, %s374
        %p376 = pneg %p47
        %p377 = pneg %p44
        %p378 = scmp.lt.s32.totalorder %s26, 1
        %s379 = scalar_select %p378, %s26, 1
        %s380 = smul.addr %s379, 8
        %s381 = smul.addr %s380, 8
        %s382 = scalar_lea.vmem %s1, %s381
        %p383 = pneg %p73
        %p384 = pneg %p70
        %p385 = pneg %p94
        %p386 = pneg %p91
        %p387 = pneg %p115
        %p388 = pneg %p112
        %p389 = pneg %p136
        %p390 = pneg %p133
        %p391 = pneg %p157
        %p392 = pneg %p154
        %p393 = pneg %p178
        %p394 = pneg %p175
        %p395 = pneg %p199
        %p396 = pneg %p196
        %p397 = pneg %p220
        %p398 = pneg %p217
        %p399 = pneg %p246
        %p400 = pneg %p243
        %s401 = sand.u32 %s233, 1
        %s402 = scalar_lea.sflag [#allocation4], %s401
        %s403 = sand.u32 %s233, 1
        %s404 = smul.addr %s403, 48
        %s405 = scalar_lea.vmem [#allocation10], %s404
        %p406 = scmp.lt.s32.totalorder %s26, 1
        %s407 = scalar_select %p406, %s26, 1
        %s408 = smul.addr %s407, 8
        %s409 = smul.addr %s408, 8
        %s410 = scalar_lea.vmem %s0, %s409
        %p411 = scmp.lt.s32.totalorder %s26, 1
        %s412 = scalar_select %p411, %s26, 1
        %s413 = smul.addr %s412, 8
        %s414 = smul.addr %s413, 8
        %s415 = scalar_lea.vmem %s1, %s414
        %v416 = vld [vmem:[%s410] sm:$0xff]
        %v417 = vld [vmem:[%s410 + $0x8] sm:$0xff]
        %v418 = vld [vmem:[%s410 + $0x10] sm:$0xff]
        %v419 = vld [vmem:[%s410 + $0x18] sm:$0xff]
        %v420 = vld [vmem:[%s410 + $0x20] sm:$0xff]
        %v421 = vld [vmem:[%s410 + $0x28] sm:$0xff]
        %v422 = vld [vmem:[%s410 + $0x30] sm:$0xff]
        %v423 = vld [vmem:[%s410 + $0x38] sm:$0xff]
        %v424 = vld [vmem:[%s415] sm:$0xff]
        %v425 = vld [vmem:[%s415 + $0x8] sm:$0xff]
        %v426 = vld [vmem:[%s415 + $0x10] sm:$0xff]
        %v427 = vld [vmem:[%s415 + $0x18] sm:$0xff]
        %v428 = vld [vmem:[%s415 + $0x20] sm:$0xff]
        %v429 = vld [vmem:[%s415 + $0x28] sm:$0xff]
        %v430 = vld [vmem:[%s415 + $0x30] sm:$0xff]
        %v431 = vld [vmem:[%s415 + $0x38] sm:$0xff]
        %v432 = vld [vmem:[#allocation2] sm:$0xff]
        %v433 = vld [vmem:[#allocation2 + $0x8] sm:$0xff]
        %v434 = vld [vmem:[#allocation2 + $0x10] sm:$0xff]
        %v435 = vld [vmem:[#allocation2 + $0x18] sm:$0xff]
        %v436 = vld [vmem:[#allocation2 + $0x20] sm:$0xff]
        %v437 = vld [vmem:[#allocation2 + $0x28] sm:$0xff]
        %v438 = vld [vmem:[#allocation2 + $0x30] sm:$0xff]
        %v439 = vld [vmem:[#allocation2 + $0x38] sm:$0xff]
        %v440 = vld [vmem:[#allocation2 + $0x40] sm:$0xff]
        %v441 = vld [vmem:[#allocation2 + $0x48] sm:$0xff]
        %v442 = vld [vmem:[#allocation2 + $0x50] sm:$0xff]
        %v443 = vld [vmem:[#allocation2 + $0x58] sm:$0xff]
        %v444 = vld [vmem:[#allocation2 + $0x60] sm:$0xff]
        %v445 = vld [vmem:[#allocation2 + $0x68] sm:$0xff]
        %v446 = vld [vmem:[#allocation2 + $0x70] sm:$0xff]
        %v447 = vld [vmem:[#allocation2 + $0x78] sm:$0xff]
        %v448 = vld [vmem:[%s3] sm:$0x3]
        %v450 = vperm.slane %v448, 0
        %v451 = vperm.slane %v448, 1
        %vm454 = vcmask 523264
        %v456 = vsel %vm454, %v416, 0
        %v459 = vsel %vm454, %v417, 0
        %v462 = vsel %vm454, %v418, 0
        %v465 = vsel %vm454, %v419, 0
        %v468 = vsel %vm454, %v420, 0
        %v471 = vsel %vm454, %v421, 0
        %v474 = vsel %vm454, %v422, 0
        %v477 = vsel %vm454, %v423, 0
        %479 = vmatpush.msra.mxu0 0.0
        %480 = vmatpush.msra.mxu0 0.0
        %481 = vmatpush.msra.mxu0 0.0
        %482 = vmatpush.msra.mxu0 0.0
        %483 = vmatpush.msra.mxu0 0.0
        %484 = vmatpush.msra.mxu0 0.0
        %485 = vmatpush.msra.mxu0 0.0
        %486 = vmatpush.msra.mxu0 0.0
        %487 = vmatpush.msra.mxu0 %v446
        %488 = vmatpush.msra.mxu0 %v444
        %489 = vmatpush.msra.mxu0 %v442
        %490 = vmatpush.msra.mxu0 %v440
        %491 = vmatpush.msra.mxu0 %v438
        %492 = vmatpush.msra.mxu0 %v436
        %493 = vmatpush.msra.mxu0 %v434
        %494 = vmatpush.msra.mxu0 %v432
        %495 = vmatmul.f32.gmra.mxu0 %v456
        %v496 = vpop.f32.mrf.mxu0
        %v497 = vadd.f32 %v450, %v496
        %498 = vmatmul.f32.gmra.mxu0 %v459
        %v499 = vpop.f32.mrf.mxu0
        %v500 = vadd.f32 %v450, %v499
        %501 = vmatmul.f32.gmra.mxu0 %v462
        %v502 = vpop.f32.mrf.mxu0
        %v503 = vadd.f32 %v450, %v502
        %504 = vmatmul.f32.gmra.mxu0 %v465
        %v505 = vpop.f32.mrf.mxu0
        %v506 = vadd.f32 %v450, %v505
        %507 = vmatmul.f32.gmra.mxu0 %v468
        %v508 = vpop.f32.mrf.mxu0
        %v509 = vadd.f32 %v450, %v508
        %510 = vmatmul.f32.gmra.mxu0 %v471
        %v511 = vpop.f32.mrf.mxu0
        %v512 = vadd.f32 %v450, %v511
        %513 = vmatmul.f32.gmra.mxu0 %v474
        %v514 = vpop.f32.mrf.mxu0
        %v515 = vadd.f32 %v450, %v514
        %516 = vmatmul.f32.gmra.mxu0 %v477
        %v517 = vpop.f32.mrf.mxu0
        %v518 = vadd.f32 %v450, %v517
        %519 = vdwg.mxu0
        %520 = vmatpush.msra.mxu0 0.0
        %521 = vmatpush.msra.mxu0 0.0
        %522 = vmatpush.msra.mxu0 0.0
        %523 = vmatpush.msra.mxu0 0.0
        %524 = vmatpush.msra.mxu0 0.0
        %525 = vmatpush.msra.mxu0 0.0
        %526 = vmatpush.msra.mxu0 0.0
        %527 = vmatpush.msra.mxu0 0.0
        %528 = vmatpush.msra.mxu0 %v447
        %529 = vmatpush.msra.mxu0 %v445
        %530 = vmatpush.msra.mxu0 %v443
        %531 = vmatpush.msra.mxu0 %v441
        %532 = vmatpush.msra.mxu0 %v439
        %533 = vmatpush.msra.mxu0 %v437
        %534 = vmatpush.msra.mxu0 %v435
        %535 = vmatpush.msra.mxu0 %v433
        %536 = vmatmul.f32.gmra.mxu0 %v456
        %v537 = vpop.f32.mrf.mxu0
        %v538 = vadd.f32 %v451, %v537
        %539 = vmatmul.f32.gmra.mxu0 %v459
        %v540 = vpop.f32.mrf.mxu0
        %v541 = vadd.f32 %v451, %v540
        %542 = vmatmul.f32.gmra.mxu0 %v462
        %v543 = vpop.f32.mrf.mxu0
        %v544 = vadd.f32 %v451, %v543
        %545 = vmatmul.f32.gmra.mxu0 %v465
        %v546 = vpop.f32.mrf.mxu0
        %v547 = vadd.f32 %v451, %v546
        %548 = vmatmul.f32.gmra.mxu0 %v468
        %v549 = vpop.f32.mrf.mxu0
        %v550 = vadd.f32 %v451, %v549
        %551 = vmatmul.f32.gmra.mxu0 %v471
        %v552 = vpop.f32.mrf.mxu0
        %v553 = vadd.f32 %v451, %v552
        %554 = vmatmul.f32.gmra.mxu0 %v474
        %v555 = vpop.f32.mrf.mxu0
        %v556 = vadd.f32 %v451, %v555
        %557 = vmatmul.f32.gmra.mxu0 %v477
        %v558 = vpop.f32.mrf.mxu0
        %v559 = vadd.f32 %v451, %v558
        %560 = vdwg.mxu0
        %v561 = vld [vmem:[%s4] sm:$0xff]
        %v562 = vld [vmem:[%s4 + $0x8] sm:$0xff]
        %v563 = vld [vmem:[%s4 + $0x10] sm:$0xff]
        %v564 = vld [vmem:[%s4 + $0x18] sm:$0xff]
        %v565 = vld [vmem:[%s4 + $0x20] sm:$0xff]
        %v566 = vld [vmem:[%s4 + $0x28] sm:$0xff]
        %v567 = vld [vmem:[%s4 + $0x30] sm:$0xff]
        %v568 = vld [vmem:[%s4 + $0x38] sm:$0xff]
        %v569 = vld [vmem:[%s4 + $0x40] sm:$0xff]
        %v570 = vld [vmem:[%s4 + $0x48] sm:$0xff]
        %v571 = vld [vmem:[%s4 + $0x50] sm:$0xff]
        %v572 = vld [vmem:[%s4 + $0x58] sm:$0xff]
        %v573 = vld [vmem:[#allocation5] sm:$0x3]
        %v575 = vperm.slane %v573, 0
        %v576 = vperm.slane %v573, 1
        %vm579 = vcmask 392192
        %v581 = vsel %vm579, %v424, 0
        %v584 = vsel %vm579, %v425, 0
        %v587 = vsel %vm579, %v426, 0
        %v590 = vsel %vm579, %v427, 0
        %v593 = vsel %vm579, %v428, 0
        %v596 = vsel %vm579, %v429, 0
        %v599 = vsel %vm579, %v430, 0
        %v602 = vsel %vm579, %v431, 0
        %604 = vmatpush.msra.mxu0 0.0
        %605 = vmatpush.msra.mxu0 0.0
        %606 = vmatpush.msra.mxu0 0.0
        %607 = vmatpush.msra.mxu0 0.0
        %608 = vmatpush.msra.mxu0 0.0
        %609 = vmatpush.msra.mxu0 0.0
        %610 = vmatpush.msra.mxu0 0.0
        %611 = vmatpush.msra.mxu0 0.0
        %612 = vmatpush.msra.mxu0 0.0
        %613 = vmatpush.msra.mxu0 0.0
        %614 = vmatpush.msra.mxu0 %v571
        %615 = vmatpush.msra.mxu0 %v569
        %616 = vmatpush.msra.mxu0 %v567
        %617 = vmatpush.msra.mxu0 %v565
        %618 = vmatpush.msra.mxu0 %v563
        %619 = vmatpush.msra.mxu0 %v561
        %620 = vmatmul.f32.gmra.mxu0 %v581
        %v621 = vpop.f32.mrf.mxu0
        %v622 = vadd.f32 %v575, %v621
        %623 = vmatmul.f32.gmra.mxu0 %v584
        %v624 = vpop.f32.mrf.mxu0
        %v625 = vadd.f32 %v575, %v624
        %626 = vmatmul.f32.gmra.mxu0 %v587
        %v627 = vpop.f32.mrf.mxu0
        %v628 = vadd.f32 %v575, %v627
        %629 = vmatmul.f32.gmra.mxu0 %v590
        %v630 = vpop.f32.mrf.mxu0
        %v631 = vadd.f32 %v575, %v630
        %632 = vmatmul.f32.gmra.mxu0 %v593
        %v633 = vpop.f32.mrf.mxu0
        %v634 = vadd.f32 %v575, %v633
        %635 = vmatmul.f32.gmra.mxu0 %v596
        %v636 = vpop.f32.mrf.mxu0
        %v637 = vadd.f32 %v575, %v636
        %638 = vmatmul.f32.gmra.mxu0 %v599
        %v639 = vpop.f32.mrf.mxu0
        %v640 = vadd.f32 %v575, %v639
        %641 = vmatmul.f32.gmra.mxu0 %v602
        %v642 = vpop.f32.mrf.mxu0
        %v643 = vadd.f32 %v575, %v642
        %644 = vdwg.mxu0
        %645 = vmatpush.msra.mxu0 0.0
        %646 = vmatpush.msra.mxu0 0.0
        %647 = vmatpush.msra.mxu0 0.0
        %648 = vmatpush.msra.mxu0 0.0
        %649 = vmatpush.msra.mxu0 0.0
        %650 = vmatpush.msra.mxu0 0.0
        %651 = vmatpush.msra.mxu0 0.0
        %652 = vmatpush.msra.mxu0 0.0
        %653 = vmatpush.msra.mxu0 0.0
        %654 = vmatpush.msra.mxu0 0.0
        %655 = vmatpush.msra.mxu0 %v572
        %656 = vmatpush.msra.mxu0 %v570
        %657 = vmatpush.msra.mxu0 %v568
        %658 = vmatpush.msra.mxu0 %v566
        %659 = vmatpush.msra.mxu0 %v564
        %660 = vmatpush.msra.mxu0 %v562
        %661 = vmatmul.f32.gmra.mxu0 %v581
        %v662 = vpop.f32.mrf.mxu0
        %v663 = vadd.f32 %v576, %v662
        %664 = vmatmul.f32.gmra.mxu0 %v584
        %v665 = vpop.f32.mrf.mxu0
        %v666 = vadd.f32 %v576, %v665
        %667 = vmatmul.f32.gmra.mxu0 %v587
        %v668 = vpop.f32.mrf.mxu0
        %v669 = vadd.f32 %v576, %v668
        %670 = vmatmul.f32.gmra.mxu0 %v590
        %v671 = vpop.f32.mrf.mxu0
        %v672 = vadd.f32 %v576, %v671
        %673 = vmatmul.f32.gmra.mxu0 %v593
        %v674 = vpop.f32.mrf.mxu0
        %v675 = vadd.f32 %v576, %v674
        %676 = vmatmul.f32.gmra.mxu0 %v596
        %v677 = vpop.f32.mrf.mxu0
        %v678 = vadd.f32 %v576, %v677
        %679 = vmatmul.f32.gmra.mxu0 %v599
        %v680 = vpop.f32.mrf.mxu0
        %v681 = vadd.f32 %v576, %v680
        %682 = vmatmul.f32.gmra.mxu0 %v602
        %v683 = vpop.f32.mrf.mxu0
        %v684 = vadd.f32 %v576, %v683
        %685 = vdwg.mxu0
        %694 = vrot.lane.b32.xlu0 %v622, 80
        %v695 = vpop.permute.xlu0 %694
        %696 = vrot.lane.b32.xlu0 %v625, 80
        %v697 = vpop.permute.xlu0 %696
        %698 = vrot.lane.b32.xlu0 %v628, 80
        %v699 = vpop.permute.xlu0 %698
        %700 = vrot.lane.b32.xlu0 %v631, 80
        %v701 = vpop.permute.xlu0 %700
        %702 = vrot.lane.b32.xlu0 %v634, 80
        %v703 = vpop.permute.xlu0 %702
        %704 = vrot.lane.b32.xlu0 %v637, 80
        %v705 = vpop.permute.xlu0 %704
        %706 = vrot.lane.b32.xlu0 %v640, 80
        %v707 = vpop.permute.xlu0 %706
        %708 = vrot.lane.b32.xlu0 %v643, 80
        %v709 = vpop.permute.xlu0 %708
        %vm710 = vcmask 130048
        %v712 = vsel %vm710, %v497, 0
        %v715 = vsel %vm710, %v500, 0
        %v718 = vsel %vm710, %v503, 0
        %v721 = vsel %vm710, %v506, 0
        %v724 = vsel %vm710, %v509, 0
        %v727 = vsel %vm710, %v512, 0
        %v730 = vsel %vm710, %v515, 0
        %v733 = vsel %vm710, %v518, 0
        %v735 = vsel %vm710, %v695, 0
        %v737 = vsel %vm710, %v697, 0
        %v739 = vsel %vm710, %v699, 0
        %v741 = vsel %vm710, %v701, 0
        %v743 = vsel %vm710, %v703, 0
        %v745 = vsel %vm710, %v705, 0
        %v747 = vsel %vm710, %v707, 0
        %v749 = vsel %vm710, %v709, 0
        %751 = vmatpush.xpose.msra.mxu0 0.0
        %752 = vmatpush.xpose.msra.mxu0 0.0
        %753 = vmatpush.xpose.msra.mxu0 0.0
        %754 = vmatpush.xpose.msra.mxu0 0.0
        %755 = vmatpush.xpose.msra.mxu0 0.0
        %756 = vmatpush.xpose.msra.mxu0 0.0
        %757 = vmatpush.xpose.msra.mxu0 0.0
        %758 = vmatpush.xpose.msra.mxu0 0.0
        %759 = vmatpush.xpose.msra.mxu0 %v749
        %760 = vmatpush.xpose.msra.mxu0 %v747
        %761 = vmatpush.xpose.msra.mxu0 %v745
        %762 = vmatpush.xpose.msra.mxu0 %v743
        %763 = vmatpush.xpose.msra.mxu0 %v741
        %764 = vmatpush.xpose.msra.mxu0 %v739
        %765 = vmatpush.xpose.msra.mxu0 %v737
        %766 = vmatpush.xpose.msra.mxu0 %v735
        %767 = vmatmul.f32.gmra.mxu0 %v712
        %v768 = vpop.f32.mrf.mxu0
        %v769 = vadd.f32 0.0, %v768
        %770 = vmatmul.f32.gmra.mxu0 %v715
        %v771 = vpop.f32.mrf.mxu0
        %v772 = vadd.f32 0.0, %v771
        %773 = vmatmul.f32.gmra.mxu0 %v718
        %v774 = vpop.f32.mrf.mxu0
        %v775 = vadd.f32 0.0, %v774
        %776 = vmatmul.f32.gmra.mxu0 %v721
        %v777 = vpop.f32.mrf.mxu0
        %v778 = vadd.f32 0.0, %v777
        %779 = vmatmul.f32.gmra.mxu0 %v724
        %v780 = vpop.f32.mrf.mxu0
        %v781 = vadd.f32 0.0, %v780
        %782 = vmatmul.f32.gmra.mxu0 %v727
        %v783 = vpop.f32.mrf.mxu0
        %v784 = vadd.f32 0.0, %v783
        %785 = vmatmul.f32.gmra.mxu0 %v730
        %v786 = vpop.f32.mrf.mxu0
        %v787 = vadd.f32 0.0, %v786
        %788 = vmatmul.f32.gmra.mxu0 %v733
        %v789 = vpop.f32.mrf.mxu0
        %v790 = vadd.f32 0.0, %v789
        %791 = vdwg.mxu0
        %v792 = vsel %vm454, %v769, -inf
        %793 = vmax.xlane.f32.xlu0 %v792
        %v794 = vpop.xlane.xlu0 %793
        %v795 = vsel %vm454, %v772, -inf
        %796 = vmax.xlane.f32.xlu0 %v795
        %v797 = vpop.xlane.xlu0 %796
        %v798 = vsel %vm454, %v775, -inf
        %799 = vmax.xlane.f32.xlu0 %v798
        %v800 = vpop.xlane.xlu0 %799
        %v801 = vsel %vm454, %v778, -inf
        %802 = vmax.xlane.f32.xlu0 %v801
        %v803 = vpop.xlane.xlu0 %802
        %v804 = vsel %vm454, %v781, -inf
        %805 = vmax.xlane.f32.xlu0 %v804
        %v806 = vpop.xlane.xlu0 %805
        %v807 = vsel %vm454, %v784, -inf
        %808 = vmax.xlane.f32.xlu0 %v807
        %v809 = vpop.xlane.xlu0 %808
        %v810 = vsel %vm454, %v787, -inf
        %811 = vmax.xlane.f32.xlu0 %v810
        %v812 = vpop.xlane.xlu0 %811
        %v813 = vsel %vm454, %v790, -inf
        %814 = vmax.xlane.f32.xlu0 %v813
        %v815 = vpop.xlane.xlu0 %814
        %v816 = vsub.f32 %v769, %v794
        %v817 = vsub.f32 %v772, %v797
        %v818 = vsub.f32 %v775, %v800
        %v819 = vsub.f32 %v778, %v803
        %v820 = vsub.f32 %v781, %v806
        %v821 = vsub.f32 %v784, %v809
        %v822 = vsub.f32 %v787, %v812
        %v823 = vsub.f32 %v790, %v815
        %v824 = vmul.f32 %v816, 1.442695
        %v825 = vpow.pop %v824
        %v826 = vmul.f32 %v817, 1.442695
        %v827 = vpow.pop %v826
        %v828 = vmul.f32 %v818, 1.442695
        %v829 = vpow.pop %v828
        %v830 = vmul.f32 %v819, 1.442695
        %v831 = vpow.pop %v830
        %v832 = vmul.f32 %v820, 1.442695
        %v833 = vpow.pop %v832
        %v834 = vmul.f32 %v821, 1.442695
        %v835 = vpow.pop %v834
        %v836 = vmul.f32 %v822, 1.442695
        %v837 = vpow.pop %v836
        %v838 = vmul.f32 %v823, 1.442695
        %v839 = vpow.pop %v838
        %v840 = vsel %vm454, %v825, 0.0
        %841 = vadd.xlane.f32.xlu0 %v840
        %v842 = vpop.xlane.xlu0 %841
        %v843 = vsel %vm454, %v827, 0.0
        %844 = vadd.xlane.f32.xlu0 %v843
        %v845 = vpop.xlane.xlu0 %844
        %v846 = vsel %vm454, %v829, 0.0
        %847 = vadd.xlane.f32.xlu0 %v846
        %v848 = vpop.xlane.xlu0 %847
        %v849 = vsel %vm454, %v831, 0.0
        %850 = vadd.xlane.f32.xlu0 %v849
        %v851 = vpop.xlane.xlu0 %850
        %v852 = vsel %vm454, %v833, 0.0
        %853 = vadd.xlane.f32.xlu0 %v852
        %v854 = vpop.xlane.xlu0 %853
        %v855 = vsel %vm454, %v835, 0.0
        %856 = vadd.xlane.f32.xlu0 %v855
        %v857 = vpop.xlane.xlu0 %856
        %v858 = vsel %vm454, %v837, 0.0
        %859 = vadd.xlane.f32.xlu0 %v858
        %v860 = vpop.xlane.xlu0 %859
        %v861 = vsel %vm454, %v839, 0.0
        %862 = vadd.xlane.f32.xlu0 %v861
        %v863 = vpop.xlane.xlu0 %862
        %v864 = vrcp.pop %v842
        %v865 = vrcp.pop %v845
        %v866 = vrcp.pop %v848
        %v867 = vrcp.pop %v851
        %v868 = vrcp.pop %v854
        %v869 = vrcp.pop %v857
        %v870 = vrcp.pop %v860
        %v871 = vrcp.pop %v863
        %v872 = vmul.f32 %v825, %v864
        %v873 = vmul.f32 %v827, %v865
        %v874 = vmul.f32 %v829, %v866
        %v875 = vmul.f32 %v831, %v867
        %v876 = vmul.f32 %v833, %v868
        %v877 = vmul.f32 %v835, %v869
        %v878 = vmul.f32 %v837, %v870
        %v879 = vmul.f32 %v839, %v871
        %880 = vrot.lane.b32.xlu0 %v622, 32
        %v881 = vpop.permute.xlu0 %880
        %882 = vrot.lane.b32.xlu0 %v625, 32
        %v883 = vpop.permute.xlu0 %882
        %884 = vrot.lane.b32.xlu0 %v628, 32
        %v885 = vpop.permute.xlu0 %884
        %886 = vrot.lane.b32.xlu0 %v631, 32
        %v887 = vpop.permute.xlu0 %886
        %888 = vrot.lane.b32.xlu0 %v634, 32
        %v889 = vpop.permute.xlu0 %888
        %890 = vrot.lane.b32.xlu0 %v637, 32
        %v891 = vpop.permute.xlu0 %890
        %892 = vrot.lane.b32.xlu0 %v640, 32
        %v893 = vpop.permute.xlu0 %892
        %894 = vrot.lane.b32.xlu0 %v643, 32
        %v895 = vpop.permute.xlu0 %894
        %v905 = vsel %vm454, %v872, 0
        %v908 = vsel %vm454, %v873, 0
        %v911 = vsel %vm454, %v874, 0
        %v914 = vsel %vm454, %v875, 0
        %v917 = vsel %vm454, %v876, 0
        %v920 = vsel %vm454, %v877, 0
        %v923 = vsel %vm454, %v878, 0
        %v926 = vsel %vm454, %v879, 0
        %928 = vmatpush.msra.mxu0 0.0
        %929 = vmatpush.msra.mxu0 0.0
        %930 = vmatpush.msra.mxu0 0.0
        %931 = vmatpush.msra.mxu0 0.0
        %932 = vmatpush.msra.mxu0 0.0
        %933 = vmatpush.msra.mxu0 0.0
        %934 = vmatpush.msra.mxu0 0.0
        %935 = vmatpush.msra.mxu0 0.0
        %936 = vmatpush.msra.mxu0 %v895
        %937 = vmatpush.msra.mxu0 %v893
        %938 = vmatpush.msra.mxu0 %v891
        %939 = vmatpush.msra.mxu0 %v889
        %940 = vmatpush.msra.mxu0 %v887
        %941 = vmatpush.msra.mxu0 %v885
        %942 = vmatpush.msra.mxu0 %v883
        %943 = vmatpush.msra.mxu0 %v881
        %944 = vmatmul.f32.gmra.mxu0 %v905
        %v945 = vpop.f32.mrf.mxu0
        %v946 = vadd.f32 0.0, %v945
        %947 = vmatmul.f32.gmra.mxu0 %v908
        %v948 = vpop.f32.mrf.mxu0
        %v949 = vadd.f32 0.0, %v948
        %950 = vmatmul.f32.gmra.mxu0 %v911
        %v951 = vpop.f32.mrf.mxu0
        %v952 = vadd.f32 0.0, %v951
        %953 = vmatmul.f32.gmra.mxu0 %v914
        %v954 = vpop.f32.mrf.mxu0
        %v955 = vadd.f32 0.0, %v954
        %956 = vmatmul.f32.gmra.mxu0 %v917
        %v957 = vpop.f32.mrf.mxu0
        %v958 = vadd.f32 0.0, %v957
        %959 = vmatmul.f32.gmra.mxu0 %v920
        %v960 = vpop.f32.mrf.mxu0
        %v961 = vadd.f32 0.0, %v960
        %962 = vmatmul.f32.gmra.mxu0 %v923
        %v963 = vpop.f32.mrf.mxu0
        %v964 = vadd.f32 0.0, %v963
        %965 = vmatmul.f32.gmra.mxu0 %v926
        %v966 = vpop.f32.mrf.mxu0
        %v967 = vadd.f32 0.0, %v966
        %968 = vdwg.mxu0
        %969 = vrot.lane.b32.xlu0 %v497, 80
        %v970 = vpop.permute.xlu0 %969
        %971 = vrot.lane.b32.xlu0 %v500, 80
        %v972 = vpop.permute.xlu0 %971
        %973 = vrot.lane.b32.xlu0 %v503, 80
        %v974 = vpop.permute.xlu0 %973
        %975 = vrot.lane.b32.xlu0 %v506, 80
        %v976 = vpop.permute.xlu0 %975
        %977 = vrot.lane.b32.xlu0 %v509, 80
        %v978 = vpop.permute.xlu0 %977
        %979 = vrot.lane.b32.xlu0 %v512, 80
        %v980 = vpop.permute.xlu0 %979
        %981 = vrot.lane.b32.xlu0 %v515, 80
        %v982 = vpop.permute.xlu0 %981
        %983 = vrot.lane.b32.xlu0 %v518, 80
        %v984 = vpop.permute.xlu0 %983
        %v985 = vsel %vm710, %v622, 0
        %v987 = vsel %vm710, %v625, 0
        %v989 = vsel %vm710, %v628, 0
        %v991 = vsel %vm710, %v631, 0
        %v993 = vsel %vm710, %v634, 0
        %v995 = vsel %vm710, %v637, 0
        %v997 = vsel %vm710, %v640, 0
        %v999 = vsel %vm710, %v643, 0
        %v1001 = vsel %vm710, %v970, 0
        %v1003 = vsel %vm710, %v972, 0
        %v1005 = vsel %vm710, %v974, 0
        %v1007 = vsel %vm710, %v976, 0
        %v1009 = vsel %vm710, %v978, 0
        %v1011 = vsel %vm710, %v980, 0
        %v1013 = vsel %vm710, %v982, 0
        %v1015 = vsel %vm710, %v984, 0
        %1017 = vmatpush.xpose.msra.mxu0 0.0
        %1018 = vmatpush.xpose.msra.mxu0 0.0
        %1019 = vmatpush.xpose.msra.mxu0 0.0
        %1020 = vmatpush.xpose.msra.mxu0 0.0
        %1021 = vmatpush.xpose.msra.mxu0 0.0
        %1022 = vmatpush.xpose.msra.mxu0 0.0
        %1023 = vmatpush.xpose.msra.mxu0 0.0
        %1024 = vmatpush.xpose.msra.mxu0 0.0
        %1025 = vmatpush.xpose.msra.mxu0 %v1015
        %1026 = vmatpush.xpose.msra.mxu0 %v1013
        %1027 = vmatpush.xpose.msra.mxu0 %v1011
        %1028 = vmatpush.xpose.msra.mxu0 %v1009
        %1029 = vmatpush.xpose.msra.mxu0 %v1007
        %1030 = vmatpush.xpose.msra.mxu0 %v1005
        %1031 = vmatpush.xpose.msra.mxu0 %v1003
        %1032 = vmatpush.xpose.msra.mxu0 %v1001
        %1033 = vmatmul.f32.gmra.mxu0 %v985
        %v1034 = vpop.f32.mrf.mxu0
        %v1035 = vadd.f32 0.0, %v1034
        %1036 = vmatmul.f32.gmra.mxu0 %v987
        %v1037 = vpop.f32.mrf.mxu0
        %v1038 = vadd.f32 0.0, %v1037
        %1039 = vmatmul.f32.gmra.mxu0 %v989
        %v1040 = vpop.f32.mrf.mxu0
        %v1041 = vadd.f32 0.0, %v1040
        %1042 = vmatmul.f32.gmra.mxu0 %v991
        %v1043 = vpop.f32.mrf.mxu0
        %v1044 = vadd.f32 0.0, %v1043
        %1045 = vmatmul.f32.gmra.mxu0 %v993
        %v1046 = vpop.f32.mrf.mxu0
        %v1047 = vadd.f32 0.0, %v1046
        %1048 = vmatmul.f32.gmra.mxu0 %v995
        %v1049 = vpop.f32.mrf.mxu0
        %v1050 = vadd.f32 0.0, %v1049
        %1051 = vmatmul.f32.gmra.mxu0 %v997
        %v1052 = vpop.f32.mrf.mxu0
        %v1053 = vadd.f32 0.0, %v1052
        %1054 = vmatmul.f32.gmra.mxu0 %v999
        %v1055 = vpop.f32.mrf.mxu0
        %v1056 = vadd.f32 0.0, %v1055
        %1057 = vdwg.mxu0
        %v1058 = vsel %vm454, %v1035, -inf
        %1059 = vmax.xlane.f32.xlu0 %v1058
        %v1060 = vpop.xlane.xlu0 %1059
        %v1061 = vsel %vm454, %v1038, -inf
        %1062 = vmax.xlane.f32.xlu0 %v1061
        %v1063 = vpop.xlane.xlu0 %1062
        %v1064 = vsel %vm454, %v1041, -inf
        %1065 = vmax.xlane.f32.xlu0 %v1064
        %v1066 = vpop.xlane.xlu0 %1065
        %v1067 = vsel %vm454, %v1044, -inf
        %1068 = vmax.xlane.f32.xlu0 %v1067
        %v1069 = vpop.xlane.xlu0 %1068
        %v1070 = vsel %vm454, %v1047, -inf
        %1071 = vmax.xlane.f32.xlu0 %v1070
        %v1072 = vpop.xlane.xlu0 %1071
        %v1073 = vsel %vm454, %v1050, -inf
        %1074 = vmax.xlane.f32.xlu0 %v1073
        %v1075 = vpop.xlane.xlu0 %1074
        %v1076 = vsel %vm454, %v1053, -inf
        %1077 = vmax.xlane.f32.xlu0 %v1076
        %v1078 = vpop.xlane.xlu0 %1077
        %v1079 = vsel %vm454, %v1056, -inf
        %1080 = vmax.xlane.f32.xlu0 %v1079
        %v1081 = vpop.xlane.xlu0 %1080
        %v1082 = vsub.f32 %v1035, %v1060
        %v1083 = vsub.f32 %v1038, %v1063
        %v1084 = vsub.f32 %v1041, %v1066
        %v1085 = vsub.f32 %v1044, %v1069
        %v1086 = vsub.f32 %v1047, %v1072
        %v1087 = vsub.f32 %v1050, %v1075
        %v1088 = vsub.f32 %v1053, %v1078
        %v1089 = vsub.f32 %v1056, %v1081
        %v1090 = vmul.f32 %v1082, 1.442695
        %v1091 = vpow.pop %v1090
        %v1092 = vmul.f32 %v1083, 1.442695
        %v1093 = vpow.pop %v1092
        %v1094 = vmul.f32 %v1084, 1.442695
        %v1095 = vpow.pop %v1094
        %v1096 = vmul.f32 %v1085, 1.442695
        %v1097 = vpow.pop %v1096
        %v1098 = vmul.f32 %v1086, 1.442695
        %v1099 = vpow.pop %v1098
        %v1100 = vmul.f32 %v1087, 1.442695
        %v1101 = vpow.pop %v1100
        %v1102 = vmul.f32 %v1088, 1.442695
        %v1103 = vpow.pop %v1102
        %v1104 = vmul.f32 %v1089, 1.442695
        %v1105 = vpow.pop %v1104
        %v1106 = vsel %vm454, %v1091, 0.0
        %1107 = vadd.xlane.f32.xlu0 %v1106
        %v1108 = vpop.xlane.xlu0 %1107
        %v1109 = vsel %vm454, %v1093, 0.0
        %1110 = vadd.xlane.f32.xlu0 %v1109
        %v1111 = vpop.xlane.xlu0 %1110
        %v1112 = vsel %vm454, %v1095, 0.0
        %1113 = vadd.xlane.f32.xlu0 %v1112
        %v1114 = vpop.xlane.xlu0 %1113
        %v1115 = vsel %vm454, %v1097, 0.0
        %1116 = vadd.xlane.f32.xlu0 %v1115
        %v1117 = vpop.xlane.xlu0 %1116
        %v1118 = vsel %vm454, %v1099, 0.0
        %1119 = vadd.xlane.f32.xlu0 %v1118
        %v1120 = vpop.xlane.xlu0 %1119
        %v1121 = vsel %vm454, %v1101, 0.0
        %1122 = vadd.xlane.f32.xlu0 %v1121
        %v1123 = vpop.xlane.xlu0 %1122
        %v1124 = vsel %vm454, %v1103, 0.0
        %1125 = vadd.xlane.f32.xlu0 %v1124
        %v1126 = vpop.xlane.xlu0 %1125
        %v1127 = vsel %vm454, %v1105, 0.0
        %1128 = vadd.xlane.f32.xlu0 %v1127
        %v1129 = vpop.xlane.xlu0 %1128
        %v1130 = vrcp.pop %v1108
        %v1131 = vrcp.pop %v1111
        %v1132 = vrcp.pop %v1114
        %v1133 = vrcp.pop %v1117
        %v1134 = vrcp.pop %v1120
        %v1135 = vrcp.pop %v1123
        %v1136 = vrcp.pop %v1126
        %v1137 = vrcp.pop %v1129
        %v1138 = vmul.f32 %v1091, %v1130
        %v1139 = vmul.f32 %v1093, %v1131
        %v1140 = vmul.f32 %v1095, %v1132
        %v1141 = vmul.f32 %v1097, %v1133
        %v1142 = vmul.f32 %v1099, %v1134
        %v1143 = vmul.f32 %v1101, %v1135
        %v1144 = vmul.f32 %v1103, %v1136
        %v1145 = vmul.f32 %v1105, %v1137
        %1146 = vrot.lane.b32.xlu0 %v497, 32
        %v1147 = vpop.permute.xlu0 %1146
        %1148 = vrot.lane.b32.xlu0 %v500, 32
        %v1149 = vpop.permute.xlu0 %1148
        %1150 = vrot.lane.b32.xlu0 %v503, 32
        %v1151 = vpop.permute.xlu0 %1150
        %1152 = vrot.lane.b32.xlu0 %v506, 32
        %v1153 = vpop.permute.xlu0 %1152
        %1154 = vrot.lane.b32.xlu0 %v509, 32
        %v1155 = vpop.permute.xlu0 %1154
        %1156 = vrot.lane.b32.xlu0 %v512, 32
        %v1157 = vpop.permute.xlu0 %1156
        %1158 = vrot.lane.b32.xlu0 %v515, 32
        %v1159 = vpop.permute.xlu0 %1158
        %1160 = vrot.lane.b32.xlu0 %v518, 32
        %v1161 = vpop.permute.xlu0 %1160
        %v1171 = vsel %vm454, %v1138, 0
        %v1174 = vsel %vm454, %v1139, 0
        %v1177 = vsel %vm454, %v1140, 0
        %v1180 = vsel %vm454, %v1141, 0
        %v1183 = vsel %vm454, %v1142, 0
        %v1186 = vsel %vm454, %v1143, 0
        %v1189 = vsel %vm454, %v1144, 0
        %v1192 = vsel %vm454, %v1145, 0
        %1194 = vmatpush.msra.mxu0 0.0
        %1195 = vmatpush.msra.mxu0 0.0
        %1196 = vmatpush.msra.mxu0 0.0
        %1197 = vmatpush.msra.mxu0 0.0
        %1198 = vmatpush.msra.mxu0 0.0
        %1199 = vmatpush.msra.mxu0 0.0
        %1200 = vmatpush.msra.mxu0 0.0
        %1201 = vmatpush.msra.mxu0 0.0
        %1202 = vmatpush.msra.mxu0 %v1161
        %1203 = vmatpush.msra.mxu0 %v1159
        %1204 = vmatpush.msra.mxu0 %v1157
        %1205 = vmatpush.msra.mxu0 %v1155
        %1206 = vmatpush.msra.mxu0 %v1153
        %1207 = vmatpush.msra.mxu0 %v1151
        %1208 = vmatpush.msra.mxu0 %v1149
        %1209 = vmatpush.msra.mxu0 %v1147
        %1210 = vmatmul.f32.gmra.mxu0 %v1171
        %v1211 = vpop.f32.mrf.mxu0
        %v1212 = vadd.f32 0.0, %v1211
        %1213 = vmatmul.f32.gmra.mxu0 %v1174
        %v1214 = vpop.f32.mrf.mxu0
        %v1215 = vadd.f32 0.0, %v1214
        %1216 = vmatmul.f32.gmra.mxu0 %v1177
        %v1217 = vpop.f32.mrf.mxu0
        %v1218 = vadd.f32 0.0, %v1217
        %1219 = vmatmul.f32.gmra.mxu0 %v1180
        %v1220 = vpop.f32.mrf.mxu0
        %v1221 = vadd.f32 0.0, %v1220
        %1222 = vmatmul.f32.gmra.mxu0 %v1183
        %v1223 = vpop.f32.mrf.mxu0
        %v1224 = vadd.f32 0.0, %v1223
        %1225 = vmatmul.f32.gmra.mxu0 %v1186
        %v1226 = vpop.f32.mrf.mxu0
        %v1227 = vadd.f32 0.0, %v1226
        %1228 = vmatmul.f32.gmra.mxu0 %v1189
        %v1229 = vpop.f32.mrf.mxu0
        %v1230 = vadd.f32 0.0, %v1229
        %1231 = vmatmul.f32.gmra.mxu0 %v1192
        %v1232 = vpop.f32.mrf.mxu0
        %v1233 = vadd.f32 0.0, %v1232
        %1234 = vdwg.mxu0
        %v1235 = vld [vmem:[#allocation7] sm:$0xff]
        %v1236 = vld [vmem:[#allocation7 + $0x8] sm:$0xff]
        %v1237 = vld [vmem:[#allocation8] sm:$0xff]
        %v1238 = vld [vmem:[#allocation8 + $0x8] sm:$0xff]
        %v1240 = vsel %vm710, %v1212, 0
        %v1243 = vsel %vm710, %v1215, 0
        %v1246 = vsel %vm710, %v1218, 0
        %v1249 = vsel %vm710, %v1221, 0
        %v1252 = vsel %vm710, %v1224, 0
        %v1255 = vsel %vm710, %v1227, 0
        %v1258 = vsel %vm710, %v1230, 0
        %v1261 = vsel %vm710, %v1233, 0
        %1263 = vmatpush.msra.mxu0 0.0
        %1264 = vmatpush.msra.mxu0 0.0
        %1265 = vmatpush.msra.mxu0 0.0
        %1266 = vmatpush.msra.mxu0 0.0
        %1267 = vmatpush.msra.mxu0 0.0
        %1268 = vmatpush.msra.mxu0 0.0
        %1269 = vmatpush.msra.mxu0 0.0
        %1270 = vmatpush.msra.mxu0 0.0
        %1271 = vmatpush.msra.mxu0 0.0
        %1272 = vmatpush.msra.mxu0 0.0
        %1273 = vmatpush.msra.mxu0 0.0
        %1274 = vmatpush.msra.mxu0 0.0
        %1275 = vmatpush.msra.mxu0 0.0
        %1276 = vmatpush.msra.mxu0 0.0
        %1277 = vmatpush.msra.mxu0 %v1238
        %1278 = vmatpush.msra.mxu0 %v1237
        %1279 = vmatmul.f32.gmra.mxu0 %v1240
        %v1280 = vpop.f32.mrf.mxu0
        %v1281 = vadd.f32 0.0, %v1280
        %1282 = vmatmul.f32.gmra.mxu0 %v1243
        %v1283 = vpop.f32.mrf.mxu0
        %v1284 = vadd.f32 0.0, %v1283
        %1285 = vmatmul.f32.gmra.mxu0 %v1246
        %v1286 = vpop.f32.mrf.mxu0
        %v1287 = vadd.f32 0.0, %v1286
        %1288 = vmatmul.f32.gmra.mxu0 %v1249
        %v1289 = vpop.f32.mrf.mxu0
        %v1290 = vadd.f32 0.0, %v1289
        %1291 = vmatmul.f32.gmra.mxu0 %v1252
        %v1292 = vpop.f32.mrf.mxu0
        %v1293 = vadd.f32 0.0, %v1292
        %1294 = vmatmul.f32.gmra.mxu0 %v1255
        %v1295 = vpop.f32.mrf.mxu0
        %v1296 = vadd.f32 0.0, %v1295
        %1297 = vmatmul.f32.gmra.mxu0 %v1258
        %v1298 = vpop.f32.mrf.mxu0
        %v1299 = vadd.f32 0.0, %v1298
        %1300 = vmatmul.f32.gmra.mxu0 %v1261
        %v1301 = vpop.f32.mrf.mxu0
        %v1302 = vadd.f32 0.0, %v1301
        %1303 = vdwg.mxu0
        %v1305 = vsel %vm710, %v946, 0
        %v1308 = vsel %vm710, %v949, 0
        %v1311 = vsel %vm710, %v952, 0
        %v1314 = vsel %vm710, %v955, 0
        %v1317 = vsel %vm710, %v958, 0
        %v1320 = vsel %vm710, %v961, 0
        %v1323 = vsel %vm710, %v964, 0
        %v1326 = vsel %vm710, %v967, 0
        %1328 = vmatpush.msra.mxu0 0.0
        %1329 = vmatpush.msra.mxu0 0.0
        %1330 = vmatpush.msra.mxu0 0.0
        %1331 = vmatpush.msra.mxu0 0.0
        %1332 = vmatpush.msra.mxu0 0.0
        %1333 = vmatpush.msra.mxu0 0.0
        %1334 = vmatpush.msra.mxu0 0.0
        %1335 = vmatpush.msra.mxu0 0.0
        %1336 = vmatpush.msra.mxu0 0.0
        %1337 = vmatpush.msra.mxu0 0.0
        %1338 = vmatpush.msra.mxu0 0.0
        %1339 = vmatpush.msra.mxu0 0.0
        %1340 = vmatpush.msra.mxu0 0.0
        %1341 = vmatpush.msra.mxu0 0.0
        %1342 = vmatpush.msra.mxu0 %v1236
        %1343 = vmatpush.msra.mxu0 %v1235
        %1344 = vmatmul.f32.gmra.mxu0 %v1305
        %v1345 = vpop.f32.mrf.mxu0
        %v1346 = vadd.f32 %v1281, %v1345
        %1347 = vmatmul.f32.gmra.mxu0 %v1308
        %v1348 = vpop.f32.mrf.mxu0
        %v1349 = vadd.f32 %v1284, %v1348
        %1350 = vmatmul.f32.gmra.mxu0 %v1311
        %v1351 = vpop.f32.mrf.mxu0
        %v1352 = vadd.f32 %v1287, %v1351
        %1353 = vmatmul.f32.gmra.mxu0 %v1314
        %v1354 = vpop.f32.mrf.mxu0
        %v1355 = vadd.f32 %v1290, %v1354
        %1356 = vmatmul.f32.gmra.mxu0 %v1317
        %v1357 = vpop.f32.mrf.mxu0
        %v1358 = vadd.f32 %v1293, %v1357
        %1359 = vmatmul.f32.gmra.mxu0 %v1320
        %v1360 = vpop.f32.mrf.mxu0
        %v1361 = vadd.f32 %v1296, %v1360
        %1362 = vmatmul.f32.gmra.mxu0 %v1323
        %v1363 = vpop.f32.mrf.mxu0
        %v1364 = vadd.f32 %v1299, %v1363
        %1365 = vmatmul.f32.gmra.mxu0 %v1326
        %v1366 = vpop.f32.mrf.mxu0
        %v1367 = vadd.f32 %v1302, %v1366
        %1368 = vdwg.mxu0
        %1369 = vrot.lane.b32.xlu0 %v497, 112
        %v1370 = vpop.permute.xlu0 %1369
        %1371 = vrot.lane.b32.xlu0 %v500, 112
        %v1372 = vpop.permute.xlu0 %1371
        %1373 = vrot.lane.b32.xlu0 %v503, 112
        %v1374 = vpop.permute.xlu0 %1373
        %1375 = vrot.lane.b32.xlu0 %v506, 112
        %v1376 = vpop.permute.xlu0 %1375
        %1377 = vrot.lane.b32.xlu0 %v509, 112
        %v1378 = vpop.permute.xlu0 %1377
        %1379 = vrot.lane.b32.xlu0 %v512, 112
        %v1380 = vpop.permute.xlu0 %1379
        %1381 = vrot.lane.b32.xlu0 %v515, 112
        %v1382 = vpop.permute.xlu0 %1381
        %1383 = vrot.lane.b32.xlu0 %v518, 112
        %v1384 = vpop.permute.xlu0 %1383
        %1385 = vrot.lane.b32.xlu0 %v622, 64
        %v1386 = vpop.permute.xlu0 %1385
        %1387 = vrot.lane.b32.xlu0 %v625, 64
        %v1388 = vpop.permute.xlu0 %1387
        %1389 = vrot.lane.b32.xlu0 %v628, 64
        %v1390 = vpop.permute.xlu0 %1389
        %1391 = vrot.lane.b32.xlu0 %v631, 64
        %v1392 = vpop.permute.xlu0 %1391
        %1393 = vrot.lane.b32.xlu0 %v634, 64
        %v1394 = vpop.permute.xlu0 %1393
        %1395 = vrot.lane.b32.xlu0 %v637, 64
        %v1396 = vpop.permute.xlu0 %1395
        %1397 = vrot.lane.b32.xlu0 %v640, 64
        %v1398 = vpop.permute.xlu0 %1397
        %1399 = vrot.lane.b32.xlu0 %v643, 64
        %v1400 = vpop.permute.xlu0 %1399
        %v1401 = vsel %vm710, %v1370, 0
        %v1403 = vsel %vm710, %v1372, 0
        %v1405 = vsel %vm710, %v1374, 0
        %v1407 = vsel %vm710, %v1376, 0
        %v1409 = vsel %vm710, %v1378, 0
        %v1411 = vsel %vm710, %v1380, 0
        %v1413 = vsel %vm710, %v1382, 0
        %v1415 = vsel %vm710, %v1384, 0
        %v1417 = vsel %vm710, %v1386, 0
        %v1419 = vsel %vm710, %v1388, 0
        %v1421 = vsel %vm710, %v1390, 0
        %v1423 = vsel %vm710, %v1392, 0
        %v1425 = vsel %vm710, %v1394, 0
        %v1427 = vsel %vm710, %v1396, 0
        %v1429 = vsel %vm710, %v1398, 0
        %v1431 = vsel %vm710, %v1400, 0
        %1433 = vmatpush.xpose.msra.mxu0 0.0
        %1434 = vmatpush.xpose.msra.mxu0 0.0
        %1435 = vmatpush.xpose.msra.mxu0 0.0
        %1436 = vmatpush.xpose.msra.mxu0 0.0
        %1437 = vmatpush.xpose.msra.mxu0 0.0
        %1438 = vmatpush.xpose.msra.mxu0 0.0
        %1439 = vmatpush.xpose.msra.mxu0 0.0
        %1440 = vmatpush.xpose.msra.mxu0 0.0
        %1441 = vmatpush.xpose.msra.mxu0 %v1431
        %1442 = vmatpush.xpose.msra.mxu0 %v1429
        %1443 = vmatpush.xpose.msra.mxu0 %v1427
        %1444 = vmatpush.xpose.msra.mxu0 %v1425
        %1445 = vmatpush.xpose.msra.mxu0 %v1423
        %1446 = vmatpush.xpose.msra.mxu0 %v1421
        %1447 = vmatpush.xpose.msra.mxu0 %v1419
        %1448 = vmatpush.xpose.msra.mxu0 %v1417
        %1449 = vmatmul.f32.gmra.mxu0 %v1401
        %v1450 = vpop.f32.mrf.mxu0
        %v1451 = vadd.f32 0.0, %v1450
        %1452 = vmatmul.f32.gmra.mxu0 %v1403
        %v1453 = vpop.f32.mrf.mxu0
        %v1454 = vadd.f32 0.0, %v1453
        %1455 = vmatmul.f32.gmra.mxu0 %v1405
        %v1456 = vpop.f32.mrf.mxu0
        %v1457 = vadd.f32 0.0, %v1456
        %1458 = vmatmul.f32.gmra.mxu0 %v1407
        %v1459 = vpop.f32.mrf.mxu0
        %v1460 = vadd.f32 0.0, %v1459
        %1461 = vmatmul.f32.gmra.mxu0 %v1409
        %v1462 = vpop.f32.mrf.mxu0
        %v1463 = vadd.f32 0.0, %v1462
        %1464 = vmatmul.f32.gmra.mxu0 %v1411
        %v1465 = vpop.f32.mrf.mxu0
        %v1466 = vadd.f32 0.0, %v1465
        %1467 = vmatmul.f32.gmra.mxu0 %v1413
        %v1468 = vpop.f32.mrf.mxu0
        %v1469 = vadd.f32 0.0, %v1468
        %1470 = vmatmul.f32.gmra.mxu0 %v1415
        %v1471 = vpop.f32.mrf.mxu0
        %v1472 = vadd.f32 0.0, %v1471
        %1473 = vdwg.mxu0
        %v1474 = vsel %vm454, %v1451, -inf
        %1475 = vmax.xlane.f32.xlu0 %v1474
        %v1476 = vpop.xlane.xlu0 %1475
        %v1477 = vsel %vm454, %v1454, -inf
        %1478 = vmax.xlane.f32.xlu0 %v1477
        %v1479 = vpop.xlane.xlu0 %1478
        %v1480 = vsel %vm454, %v1457, -inf
        %1481 = vmax.xlane.f32.xlu0 %v1480
        %v1482 = vpop.xlane.xlu0 %1481
        %v1483 = vsel %vm454, %v1460, -inf
        %1484 = vmax.xlane.f32.xlu0 %v1483
        %v1485 = vpop.xlane.xlu0 %1484
        %v1486 = vsel %vm454, %v1463, -inf
        %1487 = vmax.xlane.f32.xlu0 %v1486
        %v1488 = vpop.xlane.xlu0 %1487
        %v1489 = vsel %vm454, %v1466, -inf
        %1490 = vmax.xlane.f32.xlu0 %v1489
        %v1491 = vpop.xlane.xlu0 %1490
        %v1492 = vsel %vm454, %v1469, -inf
        %1493 = vmax.xlane.f32.xlu0 %v1492
        %v1494 = vpop.xlane.xlu0 %1493
        %v1495 = vsel %vm454, %v1472, -inf
        %1496 = vmax.xlane.f32.xlu0 %v1495
        %v1497 = vpop.xlane.xlu0 %1496
        %v1498 = vsub.f32 %v1451, %v1476
        %v1499 = vsub.f32 %v1454, %v1479
        %v1500 = vsub.f32 %v1457, %v1482
        %v1501 = vsub.f32 %v1460, %v1485
        %v1502 = vsub.f32 %v1463, %v1488
        %v1503 = vsub.f32 %v1466, %v1491
        %v1504 = vsub.f32 %v1469, %v1494
        %v1505 = vsub.f32 %v1472, %v1497
        %v1506 = vmul.f32 %v1498, 1.442695
        %v1507 = vpow.pop %v1506
        %v1508 = vmul.f32 %v1499, 1.442695
        %v1509 = vpow.pop %v1508
        %v1510 = vmul.f32 %v1500, 1.442695
        %v1511 = vpow.pop %v1510
        %v1512 = vmul.f32 %v1501, 1.442695
        %v1513 = vpow.pop %v1512
        %v1514 = vmul.f32 %v1502, 1.442695
        %v1515 = vpow.pop %v1514
        %v1516 = vmul.f32 %v1503, 1.442695
        %v1517 = vpow.pop %v1516
        %v1518 = vmul.f32 %v1504, 1.442695
        %v1519 = vpow.pop %v1518
        %v1520 = vmul.f32 %v1505, 1.442695
        %v1521 = vpow.pop %v1520
        %v1522 = vsel %vm454, %v1507, 0.0
        %1523 = vadd.xlane.f32.xlu0 %v1522
        %v1524 = vpop.xlane.xlu0 %1523
        %v1525 = vsel %vm454, %v1509, 0.0
        %1526 = vadd.xlane.f32.xlu0 %v1525
        %v1527 = vpop.xlane.xlu0 %1526
        %v1528 = vsel %vm454, %v1511, 0.0
        %1529 = vadd.xlane.f32.xlu0 %v1528
        %v1530 = vpop.xlane.xlu0 %1529
        %v1531 = vsel %vm454, %v1513, 0.0
        %1532 = vadd.xlane.f32.xlu0 %v1531
        %v1533 = vpop.xlane.xlu0 %1532
        %v1534 = vsel %vm454, %v1515, 0.0
        %1535 = vadd.xlane.f32.xlu0 %v1534
        %v1536 = vpop.xlane.xlu0 %1535
        %v1537 = vsel %vm454, %v1517, 0.0
        %1538 = vadd.xlane.f32.xlu0 %v1537
        %v1539 = vpop.xlane.xlu0 %1538
        %v1540 = vsel %vm454, %v1519, 0.0
        %1541 = vadd.xlane.f32.xlu0 %v1540
        %v1542 = vpop.xlane.xlu0 %1541
        %v1543 = vsel %vm454, %v1521, 0.0
        %1544 = vadd.xlane.f32.xlu0 %v1543
        %v1545 = vpop.xlane.xlu0 %1544
        %v1546 = vrcp.pop %v1524
        %v1547 = vrcp.pop %v1527
        %v1548 = vrcp.pop %v1530
        %v1549 = vrcp.pop %v1533
        %v1550 = vrcp.pop %v1536
        %v1551 = vrcp.pop %v1539
        %v1552 = vrcp.pop %v1542
        %v1553 = vrcp.pop %v1545
        %v1554 = vmul.f32 %v1507, %v1546
        %v1555 = vmul.f32 %v1509, %v1547
        %v1556 = vmul.f32 %v1511, %v1548
        %v1557 = vmul.f32 %v1513, %v1549
        %v1558 = vmul.f32 %v1515, %v1550
        %v1559 = vmul.f32 %v1517, %v1551
        %v1560 = vmul.f32 %v1519, %v1552
        %v1561 = vmul.f32 %v1521, %v1553
        %1562 = vrot.lane.b32.xlu0 %v622, 16
        %v1563 = vpop.permute.xlu0 %1562
        %1564 = vrot.lane.b32.xlu0 %v625, 16
        %v1565 = vpop.permute.xlu0 %1564
        %1566 = vrot.lane.b32.xlu0 %v628, 16
        %v1567 = vpop.permute.xlu0 %1566
        %1568 = vrot.lane.b32.xlu0 %v631, 16
        %v1569 = vpop.permute.xlu0 %1568
        %1570 = vrot.lane.b32.xlu0 %v634, 16
        %v1571 = vpop.permute.xlu0 %1570
        %1572 = vrot.lane.b32.xlu0 %v637, 16
        %v1573 = vpop.permute.xlu0 %1572
        %1574 = vrot.lane.b32.xlu0 %v640, 16
        %v1575 = vpop.permute.xlu0 %1574
        %1576 = vrot.lane.b32.xlu0 %v643, 16
        %v1577 = vpop.permute.xlu0 %1576
        %v1587 = vsel %vm454, %v1554, 0
        %v1590 = vsel %vm454, %v1555, 0
        %v1593 = vsel %vm454, %v1556, 0
        %v1596 = vsel %vm454, %v1557, 0
        %v1599 = vsel %vm454, %v1558, 0
        %v1602 = vsel %vm454, %v1559, 0
        %v1605 = vsel %vm454, %v1560, 0
        %v1608 = vsel %vm454, %v1561, 0
        %1610 = vmatpush.msra.mxu0 0.0
        %1611 = vmatpush.msra.mxu0 0.0
        %1612 = vmatpush.msra.mxu0 0.0
        %1613 = vmatpush.msra.mxu0 0.0
        %1614 = vmatpush.msra.mxu0 0.0
        %1615 = vmatpush.msra.mxu0 0.0
        %1616 = vmatpush.msra.mxu0 0.0
        %1617 = vmatpush.msra.mxu0 0.0
        %1618 = vmatpush.msra.mxu0 %v1577
        %1619 = vmatpush.msra.mxu0 %v1575
        %1620 = vmatpush.msra.mxu0 %v1573
        %1621 = vmatpush.msra.mxu0 %v1571
        %1622 = vmatpush.msra.mxu0 %v1569
        %1623 = vmatpush.msra.mxu0 %v1567
        %1624 = vmatpush.msra.mxu0 %v1565
        %1625 = vmatpush.msra.mxu0 %v1563
        %1626 = vmatmul.f32.gmra.mxu0 %v1587
        %v1627 = vpop.f32.mrf.mxu0
        %v1628 = vadd.f32 0.0, %v1627
        %1629 = vmatmul.f32.gmra.mxu0 %v1590
        %v1630 = vpop.f32.mrf.mxu0
        %v1631 = vadd.f32 0.0, %v1630
        %1632 = vmatmul.f32.gmra.mxu0 %v1593
        %v1633 = vpop.f32.mrf.mxu0
        %v1634 = vadd.f32 0.0, %v1633
        %1635 = vmatmul.f32.gmra.mxu0 %v1596
        %v1636 = vpop.f32.mrf.mxu0
        %v1637 = vadd.f32 0.0, %v1636
        %1638 = vmatmul.f32.gmra.mxu0 %v1599
        %v1639 = vpop.f32.mrf.mxu0
        %v1640 = vadd.f32 0.0, %v1639
        %1641 = vmatmul.f32.gmra.mxu0 %v1602
        %v1642 = vpop.f32.mrf.mxu0
        %v1643 = vadd.f32 0.0, %v1642
        %1644 = vmatmul.f32.gmra.mxu0 %v1605
        %v1645 = vpop.f32.mrf.mxu0
        %v1646 = vadd.f32 0.0, %v1645
        %1647 = vmatmul.f32.gmra.mxu0 %v1608
        %v1648 = vpop.f32.mrf.mxu0
        %v1649 = vadd.f32 0.0, %v1648
        %1650 = vdwg.mxu0
        %1651 = vrot.lane.b32.xlu0 %v622, 112
        %v1652 = vpop.permute.xlu0 %1651
        %1653 = vrot.lane.b32.xlu0 %v625, 112
        %v1654 = vpop.permute.xlu0 %1653
        %1655 = vrot.lane.b32.xlu0 %v628, 112
        %v1656 = vpop.permute.xlu0 %1655
        %1657 = vrot.lane.b32.xlu0 %v631, 112
        %v1658 = vpop.permute.xlu0 %1657
        %1659 = vrot.lane.b32.xlu0 %v634, 112
        %v1660 = vpop.permute.xlu0 %1659
        %1661 = vrot.lane.b32.xlu0 %v637, 112
        %v1662 = vpop.permute.xlu0 %1661
        %1663 = vrot.lane.b32.xlu0 %v640, 112
        %v1664 = vpop.permute.xlu0 %1663
        %1665 = vrot.lane.b32.xlu0 %v643, 112
        %v1666 = vpop.permute.xlu0 %1665
        %1667 = vrot.lane.b32.xlu0 %v497, 64
        %v1668 = vpop.permute.xlu0 %1667
        %1669 = vrot.lane.b32.xlu0 %v500, 64
        %v1670 = vpop.permute.xlu0 %1669
        %1671 = vrot.lane.b32.xlu0 %v503, 64
        %v1672 = vpop.permute.xlu0 %1671
        %1673 = vrot.lane.b32.xlu0 %v506, 64
        %v1674 = vpop.permute.xlu0 %1673
        %1675 = vrot.lane.b32.xlu0 %v509, 64
        %v1676 = vpop.permute.xlu0 %1675
        %1677 = vrot.lane.b32.xlu0 %v512, 64
        %v1678 = vpop.permute.xlu0 %1677
        %1679 = vrot.lane.b32.xlu0 %v515, 64
        %v1680 = vpop.permute.xlu0 %1679
        %1681 = vrot.lane.b32.xlu0 %v518, 64
        %v1682 = vpop.permute.xlu0 %1681
        %v1683 = vsel %vm710, %v1652, 0
        %v1685 = vsel %vm710, %v1654, 0
        %v1687 = vsel %vm710, %v1656, 0
        %v1689 = vsel %vm710, %v1658, 0
        %v1691 = vsel %vm710, %v1660, 0
        %v1693 = vsel %vm710, %v1662, 0
        %v1695 = vsel %vm710, %v1664, 0
        %v1697 = vsel %vm710, %v1666, 0
        %v1699 = vsel %vm710, %v1668, 0
        %v1701 = vsel %vm710, %v1670, 0
        %v1703 = vsel %vm710, %v1672, 0
        %v1705 = vsel %vm710, %v1674, 0
        %v1707 = vsel %vm710, %v1676, 0
        %v1709 = vsel %vm710, %v1678, 0
        %v1711 = vsel %vm710, %v1680, 0
        %v1713 = vsel %vm710, %v1682, 0
        %1715 = vmatpush.xpose.msra.mxu0 0.0
        %1716 = vmatpush.xpose.msra.mxu0 0.0
        %1717 = vmatpush.xpose.msra.mxu0 0.0
        %1718 = vmatpush.xpose.msra.mxu0 0.0
        %1719 = vmatpush.xpose.msra.mxu0 0.0
        %1720 = vmatpush.xpose.msra.mxu0 0.0
        %1721 = vmatpush.xpose.msra.mxu0 0.0
        %1722 = vmatpush.xpose.msra.mxu0 0.0
        %1723 = vmatpush.xpose.msra.mxu0 %v1713
        %1724 = vmatpush.xpose.msra.mxu0 %v1711
        %1725 = vmatpush.xpose.msra.mxu0 %v1709
        %1726 = vmatpush.xpose.msra.mxu0 %v1707
        %1727 = vmatpush.xpose.msra.mxu0 %v1705
        %1728 = vmatpush.xpose.msra.mxu0 %v1703
        %1729 = vmatpush.xpose.msra.mxu0 %v1701
        %1730 = vmatpush.xpose.msra.mxu0 %v1699
        %1731 = vmatmul.f32.gmra.mxu0 %v1683
        %v1732 = vpop.f32.mrf.mxu0
        %v1733 = vadd.f32 0.0, %v1732
        %1734 = vmatmul.f32.gmra.mxu0 %v1685
        %v1735 = vpop.f32.mrf.mxu0
        %v1736 = vadd.f32 0.0, %v1735
        %1737 = vmatmul.f32.gmra.mxu0 %v1687
        %v1738 = vpop.f32.mrf.mxu0
        %v1739 = vadd.f32 0.0, %v1738
        %1740 = vmatmul.f32.gmra.mxu0 %v1689
        %v1741 = vpop.f32.mrf.mxu0
        %v1742 = vadd.f32 0.0, %v1741
        %1743 = vmatmul.f32.gmra.mxu0 %v1691
        %v1744 = vpop.f32.mrf.mxu0
        %v1745 = vadd.f32 0.0, %v1744
        %1746 = vmatmul.f32.gmra.mxu0 %v1693
        %v1747 = vpop.f32.mrf.mxu0
        %v1748 = vadd.f32 0.0, %v1747
        %1749 = vmatmul.f32.gmra.mxu0 %v1695
        %v1750 = vpop.f32.mrf.mxu0
        %v1751 = vadd.f32 0.0, %v1750
        %1752 = vmatmul.f32.gmra.mxu0 %v1697
        %v1753 = vpop.f32.mrf.mxu0
        %v1754 = vadd.f32 0.0, %v1753
        %1755 = vdwg.mxu0
        %v1756 = vsel %vm454, %v1733, -inf
        %1757 = vmax.xlane.f32.xlu0 %v1756
        %v1758 = vpop.xlane.xlu0 %1757
        %v1759 = vsel %vm454, %v1736, -inf
        %1760 = vmax.xlane.f32.xlu0 %v1759
        %v1761 = vpop.xlane.xlu0 %1760
        %v1762 = vsel %vm454, %v1739, -inf
        %1763 = vmax.xlane.f32.xlu0 %v1762
        %v1764 = vpop.xlane.xlu0 %1763
        %v1765 = vsel %vm454, %v1742, -inf
        %1766 = vmax.xlane.f32.xlu0 %v1765
        %v1767 = vpop.xlane.xlu0 %1766
        %v1768 = vsel %vm454, %v1745, -inf
        %1769 = vmax.xlane.f32.xlu0 %v1768
        %v1770 = vpop.xlane.xlu0 %1769
        %v1771 = vsel %vm454, %v1748, -inf
        %1772 = vmax.xlane.f32.xlu0 %v1771
        %v1773 = vpop.xlane.xlu0 %1772
        %v1774 = vsel %vm454, %v1751, -inf
        %1775 = vmax.xlane.f32.xlu0 %v1774
        %v1776 = vpop.xlane.xlu0 %1775
        %v1777 = vsel %vm454, %v1754, -inf
        %1778 = vmax.xlane.f32.xlu0 %v1777
        %v1779 = vpop.xlane.xlu0 %1778
        %v1780 = vsub.f32 %v1733, %v1758
        %v1781 = vsub.f32 %v1736, %v1761
        %v1782 = vsub.f32 %v1739, %v1764
        %v1783 = vsub.f32 %v1742, %v1767
        %v1784 = vsub.f32 %v1745, %v1770
        %v1785 = vsub.f32 %v1748, %v1773
        %v1786 = vsub.f32 %v1751, %v1776
        %v1787 = vsub.f32 %v1754, %v1779
        %v1788 = vmul.f32 %v1780, 1.442695
        %v1789 = vpow.pop %v1788
        %v1790 = vmul.f32 %v1781, 1.442695
        %v1791 = vpow.pop %v1790
        %v1792 = vmul.f32 %v1782, 1.442695
        %v1793 = vpow.pop %v1792
        %v1794 = vmul.f32 %v1783, 1.442695
        %v1795 = vpow.pop %v1794
        %v1796 = vmul.f32 %v1784, 1.442695
        %v1797 = vpow.pop %v1796
        %v1798 = vmul.f32 %v1785, 1.442695
        %v1799 = vpow.pop %v1798
        %v1800 = vmul.f32 %v1786, 1.442695
        %v1801 = vpow.pop %v1800
        %v1802 = vmul.f32 %v1787, 1.442695
        %v1803 = vpow.pop %v1802
        %v1804 = vsel %vm454, %v1789, 0.0
        %1805 = vadd.xlane.f32.xlu0 %v1804
        %v1806 = vpop.xlane.xlu0 %1805
        %v1807 = vsel %vm454, %v1791, 0.0
        %1808 = vadd.xlane.f32.xlu0 %v1807
        %v1809 = vpop.xlane.xlu0 %1808
        %v1810 = vsel %vm454, %v1793, 0.0
        %1811 = vadd.xlane.f32.xlu0 %v1810
        %v1812 = vpop.xlane.xlu0 %1811
        %v1813 = vsel %vm454, %v1795, 0.0
        %1814 = vadd.xlane.f32.xlu0 %v1813
        %v1815 = vpop.xlane.xlu0 %1814
        %v1816 = vsel %vm454, %v1797, 0.0
        %1817 = vadd.xlane.f32.xlu0 %v1816
        %v1818 = vpop.xlane.xlu0 %1817
        %v1819 = vsel %vm454, %v1799, 0.0
        %1820 = vadd.xlane.f32.xlu0 %v1819
        %v1821 = vpop.xlane.xlu0 %1820
        %v1822 = vsel %vm454, %v1801, 0.0
        %1823 = vadd.xlane.f32.xlu0 %v1822
        %v1824 = vpop.xlane.xlu0 %1823
        %v1825 = vsel %vm454, %v1803, 0.0
        %1826 = vadd.xlane.f32.xlu0 %v1825
        %v1827 = vpop.xlane.xlu0 %1826
        %v1828 = vrcp.pop %v1806
        %v1829 = vrcp.pop %v1809
        %v1830 = vrcp.pop %v1812
        %v1831 = vrcp.pop %v1815
        %v1832 = vrcp.pop %v1818
        %v1833 = vrcp.pop %v1821
        %v1834 = vrcp.pop %v1824
        %v1835 = vrcp.pop %v1827
        %v1836 = vmul.f32 %v1789, %v1828
        %v1837 = vmul.f32 %v1791, %v1829
        %v1838 = vmul.f32 %v1793, %v1830
        %v1839 = vmul.f32 %v1795, %v1831
        %v1840 = vmul.f32 %v1797, %v1832
        %v1841 = vmul.f32 %v1799, %v1833
        %v1842 = vmul.f32 %v1801, %v1834
        %v1843 = vmul.f32 %v1803, %v1835
        %1844 = vrot.lane.b32.xlu0 %v497, 16
        %v1845 = vpop.permute.xlu0 %1844
        %1846 = vrot.lane.b32.xlu0 %v500, 16
        %v1847 = vpop.permute.xlu0 %1846
        %1848 = vrot.lane.b32.xlu0 %v503, 16
        %v1849 = vpop.permute.xlu0 %1848
        %1850 = vrot.lane.b32.xlu0 %v506, 16
        %v1851 = vpop.permute.xlu0 %1850
        %1852 = vrot.lane.b32.xlu0 %v509, 16
        %v1853 = vpop.permute.xlu0 %1852
        %1854 = vrot.lane.b32.xlu0 %v512, 16
        %v1855 = vpop.permute.xlu0 %1854
        %1856 = vrot.lane.b32.xlu0 %v515, 16
        %v1857 = vpop.permute.xlu0 %1856
        %1858 = vrot.lane.b32.xlu0 %v518, 16
        %v1859 = vpop.permute.xlu0 %1858
        %v1869 = vsel %vm454, %v1836, 0
        %v1872 = vsel %vm454, %v1837, 0
        %v1875 = vsel %vm454, %v1838, 0
        %v1878 = vsel %vm454, %v1839, 0
        %v1881 = vsel %vm454, %v1840, 0
        %v1884 = vsel %vm454, %v1841, 0
        %v1887 = vsel %vm454, %v1842, 0
        %v1890 = vsel %vm454, %v1843, 0
        %1892 = vmatpush.msra.mxu0 0.0
        %1893 = vmatpush.msra.mxu0 0.0
        %1894 = vmatpush.msra.mxu0 0.0
        %1895 = vmatpush.msra.mxu0 0.0
        %1896 = vmatpush.msra.mxu0 0.0
        %1897 = vmatpush.msra.mxu0 0.0
        %1898 = vmatpush.msra.mxu0 0.0
        %1899 = vmatpush.msra.mxu0 0.0
        %1900 = vmatpush.msra.mxu0 %v1859
        %1901 = vmatpush.msra.mxu0 %v1857
        %1902 = vmatpush.msra.mxu0 %v1855
        %1903 = vmatpush.msra.mxu0 %v1853
        %1904 = vmatpush.msra.mxu0 %v1851
        %1905 = vmatpush.msra.mxu0 %v1849
        %1906 = vmatpush.msra.mxu0 %v1847
        %1907 = vmatpush.msra.mxu0 %v1845
        %1908 = vmatmul.f32.gmra.mxu0 %v1869
        %v1909 = vpop.f32.mrf.mxu0
        %v1910 = vadd.f32 0.0, %v1909
        %1911 = vmatmul.f32.gmra.mxu0 %v1872
        %v1912 = vpop.f32.mrf.mxu0
        %v1913 = vadd.f32 0.0, %v1912
        %1914 = vmatmul.f32.gmra.mxu0 %v1875
        %v1915 = vpop.f32.mrf.mxu0
        %v1916 = vadd.f32 0.0, %v1915
        %1917 = vmatmul.f32.gmra.mxu0 %v1878
        %v1918 = vpop.f32.mrf.mxu0
        %v1919 = vadd.f32 0.0, %v1918
        %1920 = vmatmul.f32.gmra.mxu0 %v1881
        %v1921 = vpop.f32.mrf.mxu0
        %v1922 = vadd.f32 0.0, %v1921
        %1923 = vmatmul.f32.gmra.mxu0 %v1884
        %v1924 = vpop.f32.mrf.mxu0
        %v1925 = vadd.f32 0.0, %v1924
        %1926 = vmatmul.f32.gmra.mxu0 %v1887
        %v1927 = vpop.f32.mrf.mxu0
        %v1928 = vadd.f32 0.0, %v1927
        %1929 = vmatmul.f32.gmra.mxu0 %v1890
        %v1930 = vpop.f32.mrf.mxu0
        %v1931 = vadd.f32 0.0, %v1930
        %1932 = vdwg.mxu0
        %s1933 = scalar_lea.vmem [#allocation7], 16
        %v1934 = vld [vmem:[%s1933] sm:$0xff]
        %v1935 = vld [vmem:[%s1933 + $0x8] sm:$0xff]
        %v1937 = vsel %vm710, %v1628, 0
        %v1940 = vsel %vm710, %v1631, 0
        %v1943 = vsel %vm710, %v1634, 0
        %v1946 = vsel %vm710, %v1637, 0
        %v1949 = vsel %vm710, %v1640, 0
        %v1952 = vsel %vm710, %v1643, 0
        %v1955 = vsel %vm710, %v1646, 0
        %v1958 = vsel %vm710, %v1649, 0
        %1960 = vmatpush.msra.mxu0 0.0
        %1961 = vmatpush.msra.mxu0 0.0
        %1962 = vmatpush.msra.mxu0 0.0
        %1963 = vmatpush.msra.mxu0 0.0
        %1964 = vmatpush.msra.mxu0 0.0
        %1965 = vmatpush.msra.mxu0 0.0
        %1966 = vmatpush.msra.mxu0 0.0
        %1967 = vmatpush.msra.mxu0 0.0
        %1968 = vmatpush.msra.mxu0 0.0
        %1969 = vmatpush.msra.mxu0 0.0
        %1970 = vmatpush.msra.mxu0 0.0
        %1971 = vmatpush.msra.mxu0 0.0
        %1972 = vmatpush.msra.mxu0 0.0
        %1973 = vmatpush.msra.mxu0 0.0
        %1974 = vmatpush.msra.mxu0 %v1935
        %1975 = vmatpush.msra.mxu0 %v1934
        %1976 = vmatmul.f32.gmra.mxu0 %v1937
        %v1977 = vpop.f32.mrf.mxu0
        %v1978 = vadd.f32 0.0, %v1977
        %1979 = vmatmul.f32.gmra.mxu0 %v1940
        %v1980 = vpop.f32.mrf.mxu0
        %v1981 = vadd.f32 0.0, %v1980
        %1982 = vmatmul.f32.gmra.mxu0 %v1943
        %v1983 = vpop.f32.mrf.mxu0
        %v1984 = vadd.f32 0.0, %v1983
        %1985 = vmatmul.f32.gmra.mxu0 %v1946
        %v1986 = vpop.f32.mrf.mxu0
        %v1987 = vadd.f32 0.0, %v1986
        %1988 = vmatmul.f32.gmra.mxu0 %v1949
        %v1989 = vpop.f32.mrf.mxu0
        %v1990 = vadd.f32 0.0, %v1989
        %1991 = vmatmul.f32.gmra.mxu0 %v1952
        %v1992 = vpop.f32.mrf.mxu0
        %v1993 = vadd.f32 0.0, %v1992
        %1994 = vmatmul.f32.gmra.mxu0 %v1955
        %v1995 = vpop.f32.mrf.mxu0
        %v1996 = vadd.f32 0.0, %v1995
        %1997 = vmatmul.f32.gmra.mxu0 %v1958
        %v1998 = vpop.f32.mrf.mxu0
        %v1999 = vadd.f32 0.0, %v1998
        %2000 = vdwg.mxu0
        %v2001 = vadd.f32 %v1346, %v1978
        %v2002 = vadd.f32 %v1349, %v1981
        %v2003 = vadd.f32 %v1352, %v1984
        %v2004 = vadd.f32 %v1355, %v1987
        %v2005 = vadd.f32 %v1358, %v1990
        %v2006 = vadd.f32 %v1361, %v1993
        %v2007 = vadd.f32 %v1364, %v1996
        %v2008 = vadd.f32 %v1367, %v1999
        %s2009 = scalar_lea.vmem [#allocation8], 16
        %v2010 = vld [vmem:[%s2009] sm:$0xff]
        %v2011 = vld [vmem:[%s2009 + $0x8] sm:$0xff]
        %v2013 = vsel %vm710, %v1910, 0
        %v2016 = vsel %vm710, %v1913, 0
        %v2019 = vsel %vm710, %v1916, 0
        %v2022 = vsel %vm710, %v1919, 0
        %v2025 = vsel %vm710, %v1922, 0
        %v2028 = vsel %vm710, %v1925, 0
        %v2031 = vsel %vm710, %v1928, 0
        %v2034 = vsel %vm710, %v1931, 0
        %2036 = vmatpush.msra.mxu0 0.0
        %2037 = vmatpush.msra.mxu0 0.0
        %2038 = vmatpush.msra.mxu0 0.0
        %2039 = vmatpush.msra.mxu0 0.0
        %2040 = vmatpush.msra.mxu0 0.0
        %2041 = vmatpush.msra.mxu0 0.0
        %2042 = vmatpush.msra.mxu0 0.0
        %2043 = vmatpush.msra.mxu0 0.0
        %2044 = vmatpush.msra.mxu0 0.0
        %2045 = vmatpush.msra.mxu0 0.0
        %2046 = vmatpush.msra.mxu0 0.0
        %2047 = vmatpush.msra.mxu0 0.0
        %2048 = vmatpush.msra.mxu0 0.0
        %2049 = vmatpush.msra.mxu0 0.0
        %2050 = vmatpush.msra.mxu0 %v2011
        %2051 = vmatpush.msra.mxu0 %v2010
        %2052 = vmatmul.f32.gmra.mxu0 %v2013
        %v2053 = vpop.f32.mrf.mxu0
        %v2054 = vadd.f32 0.0, %v2053
        %2055 = vmatmul.f32.gmra.mxu0 %v2016
        %v2056 = vpop.f32.mrf.mxu0
        %v2057 = vadd.f32 0.0, %v2056
        %2058 = vmatmul.f32.gmra.mxu0 %v2019
        %v2059 = vpop.f32.mrf.mxu0
        %v2060 = vadd.f32 0.0, %v2059
        %2061 = vmatmul.f32.gmra.mxu0 %v2022
        %v2062 = vpop.f32.mrf.mxu0
        %v2063 = vadd.f32 0.0, %v2062
        %2064 = vmatmul.f32.gmra.mxu0 %v2025
        %v2065 = vpop.f32.mrf.mxu0
        %v2066 = vadd.f32 0.0, %v2065
        %2067 = vmatmul.f32.gmra.mxu0 %v2028
        %v2068 = vpop.f32.mrf.mxu0
        %v2069 = vadd.f32 0.0, %v2068
        %2070 = vmatmul.f32.gmra.mxu0 %v2031
        %v2071 = vpop.f32.mrf.mxu0
        %v2072 = vadd.f32 0.0, %v2071
        %2073 = vmatmul.f32.gmra.mxu0 %v2034
        %v2074 = vpop.f32.mrf.mxu0
        %v2075 = vadd.f32 0.0, %v2074
        %2076 = vdwg.mxu0
        %v2077 = vadd.f32 %v2001, %v2054
        %v2078 = vadd.f32 %v2002, %v2057
        %v2079 = vadd.f32 %v2003, %v2060
        %v2080 = vadd.f32 %v2004, %v2063
        %v2081 = vadd.f32 %v2005, %v2066
        %v2082 = vadd.f32 %v2006, %v2069
        %v2083 = vadd.f32 %v2007, %v2072
        %v2084 = vadd.f32 %v2008, %v2075
        %2085 = vrot.lane.b32.xlu0 %v497, 96
        %v2086 = vpop.permute.xlu0 %2085
        %2087 = vrot.lane.b32.xlu0 %v500, 96
        %v2088 = vpop.permute.xlu0 %2087
        %2089 = vrot.lane.b32.xlu0 %v503, 96
        %v2090 = vpop.permute.xlu0 %2089
        %2091 = vrot.lane.b32.xlu0 %v506, 96
        %v2092 = vpop.permute.xlu0 %2091
        %2093 = vrot.lane.b32.xlu0 %v509, 96
        %v2094 = vpop.permute.xlu0 %2093
        %2095 = vrot.lane.b32.xlu0 %v512, 96
        %v2096 = vpop.permute.xlu0 %2095
        %2097 = vrot.lane.b32.xlu0 %v515, 96
        %v2098 = vpop.permute.xlu0 %2097
        %2099 = vrot.lane.b32.xlu0 %v518, 96
        %v2100 = vpop.permute.xlu0 %2099
        %2101 = vrot.lane.b32.xlu0 %v622, 48
        %v2102 = vpop.permute.xlu0 %2101
        %2103 = vrot.lane.b32.xlu0 %v625, 48
        %v2104 = vpop.permute.xlu0 %2103
        %2105 = vrot.lane.b32.xlu0 %v628, 48
        %v2106 = vpop.permute.xlu0 %2105
        %2107 = vrot.lane.b32.xlu0 %v631, 48
        %v2108 = vpop.permute.xlu0 %2107
        %2109 = vrot.lane.b32.xlu0 %v634, 48
        %v2110 = vpop.permute.xlu0 %2109
        %2111 = vrot.lane.b32.xlu0 %v637, 48
        %v2112 = vpop.permute.xlu0 %2111
        %2113 = vrot.lane.b32.xlu0 %v640, 48
        %v2114 = vpop.permute.xlu0 %2113
        %2115 = vrot.lane.b32.xlu0 %v643, 48
        %v2116 = vpop.permute.xlu0 %2115
        %v2117 = vsel %vm710, %v2086, 0
        %v2119 = vsel %vm710, %v2088, 0
        %v2121 = vsel %vm710, %v2090, 0
        %v2123 = vsel %vm710, %v2092, 0
        %v2125 = vsel %vm710, %v2094, 0
        %v2127 = vsel %vm710, %v2096, 0
        %v2129 = vsel %vm710, %v2098, 0
        %v2131 = vsel %vm710, %v2100, 0
        %v2133 = vsel %vm710, %v2102, 0
        %v2135 = vsel %vm710, %v2104, 0
        %v2137 = vsel %vm710, %v2106, 0
        %v2139 = vsel %vm710, %v2108, 0
        %v2141 = vsel %vm710, %v2110, 0
        %v2143 = vsel %vm710, %v2112, 0
        %v2145 = vsel %vm710, %v2114, 0
        %v2147 = vsel %vm710, %v2116, 0
        %2149 = vmatpush.xpose.msra.mxu0 0.0
        %2150 = vmatpush.xpose.msra.mxu0 0.0
        %2151 = vmatpush.xpose.msra.mxu0 0.0
        %2152 = vmatpush.xpose.msra.mxu0 0.0
        %2153 = vmatpush.xpose.msra.mxu0 0.0
        %2154 = vmatpush.xpose.msra.mxu0 0.0
        %2155 = vmatpush.xpose.msra.mxu0 0.0
        %2156 = vmatpush.xpose.msra.mxu0 0.0
        %2157 = vmatpush.xpose.msra.mxu0 %v2147
        %2158 = vmatpush.xpose.msra.mxu0 %v2145
        %2159 = vmatpush.xpose.msra.mxu0 %v2143
        %2160 = vmatpush.xpose.msra.mxu0 %v2141
        %2161 = vmatpush.xpose.msra.mxu0 %v2139
        %2162 = vmatpush.xpose.msra.mxu0 %v2137
        %2163 = vmatpush.xpose.msra.mxu0 %v2135
        %2164 = vmatpush.xpose.msra.mxu0 %v2133
        %2165 = vmatmul.f32.gmra.mxu0 %v2117
        %v2166 = vpop.f32.mrf.mxu0
        %v2167 = vadd.f32 0.0, %v2166
        %2168 = vmatmul.f32.gmra.mxu0 %v2119
        %v2169 = vpop.f32.mrf.mxu0
        %v2170 = vadd.f32 0.0, %v2169
        %2171 = vmatmul.f32.gmra.mxu0 %v2121
        %v2172 = vpop.f32.mrf.mxu0
        %v2173 = vadd.f32 0.0, %v2172
        %2174 = vmatmul.f32.gmra.mxu0 %v2123
        %v2175 = vpop.f32.mrf.mxu0
        %v2176 = vadd.f32 0.0, %v2175
        %2177 = vmatmul.f32.gmra.mxu0 %v2125
        %v2178 = vpop.f32.mrf.mxu0
        %v2179 = vadd.f32 0.0, %v2178
        %2180 = vmatmul.f32.gmra.mxu0 %v2127
        %v2181 = vpop.f32.mrf.mxu0
        %v2182 = vadd.f32 0.0, %v2181
        %2183 = vmatmul.f32.gmra.mxu0 %v2129
        %v2184 = vpop.f32.mrf.mxu0
        %v2185 = vadd.f32 0.0, %v2184
        %2186 = vmatmul.f32.gmra.mxu0 %v2131
        %v2187 = vpop.f32.mrf.mxu0
        %v2188 = vadd.f32 0.0, %v2187
        %2189 = vdwg.mxu0
        %v2190 = vsel %vm454, %v2167, -inf
        %2191 = vmax.xlane.f32.xlu0 %v2190
        %v2192 = vpop.xlane.xlu0 %2191
        %v2193 = vsel %vm454, %v2170, -inf
        %2194 = vmax.xlane.f32.xlu0 %v2193
        %v2195 = vpop.xlane.xlu0 %2194
        %v2196 = vsel %vm454, %v2173, -inf
        %2197 = vmax.xlane.f32.xlu0 %v2196
        %v2198 = vpop.xlane.xlu0 %2197
        %v2199 = vsel %vm454, %v2176, -inf
        %2200 = vmax.xlane.f32.xlu0 %v2199
        %v2201 = vpop.xlane.xlu0 %2200
        %v2202 = vsel %vm454, %v2179, -inf
        %2203 = vmax.xlane.f32.xlu0 %v2202
        %v2204 = vpop.xlane.xlu0 %2203
        %v2205 = vsel %vm454, %v2182, -inf
        %2206 = vmax.xlane.f32.xlu0 %v2205
        %v2207 = vpop.xlane.xlu0 %2206
        %v2208 = vsel %vm454, %v2185, -inf
        %2209 = vmax.xlane.f32.xlu0 %v2208
        %v2210 = vpop.xlane.xlu0 %2209
        %v2211 = vsel %vm454, %v2188, -inf
        %2212 = vmax.xlane.f32.xlu0 %v2211
        %v2213 = vpop.xlane.xlu0 %2212
        %v2214 = vsub.f32 %v2167, %v2192
        %v2215 = vsub.f32 %v2170, %v2195
        %v2216 = vsub.f32 %v2173, %v2198
        %v2217 = vsub.f32 %v2176, %v2201
        %v2218 = vsub.f32 %v2179, %v2204
        %v2219 = vsub.f32 %v2182, %v2207
        %v2220 = vsub.f32 %v2185, %v2210
        %v2221 = vsub.f32 %v2188, %v2213
        %v2222 = vmul.f32 %v2214, 1.442695
        %v2223 = vpow.pop %v2222
        %v2224 = vmul.f32 %v2215, 1.442695
        %v2225 = vpow.pop %v2224
        %v2226 = vmul.f32 %v2216, 1.442695
        %v2227 = vpow.pop %v2226
        %v2228 = vmul.f32 %v2217, 1.442695
        %v2229 = vpow.pop %v2228
        %v2230 = vmul.f32 %v2218, 1.442695
        %v2231 = vpow.pop %v2230
        %v2232 = vmul.f32 %v2219, 1.442695
        %v2233 = vpow.pop %v2232
        %v2234 = vmul.f32 %v2220, 1.442695
        %v2235 = vpow.pop %v2234
        %v2236 = vmul.f32 %v2221, 1.442695
        %v2237 = vpow.pop %v2236
        %v2238 = vsel %vm454, %v2223, 0.0
        %2239 = vadd.xlane.f32.xlu0 %v2238
        %v2240 = vpop.xlane.xlu0 %2239
        %v2241 = vsel %vm454, %v2225, 0.0
        %2242 = vadd.xlane.f32.xlu0 %v2241
        %v2243 = vpop.xlane.xlu0 %2242
        %v2244 = vsel %vm454, %v2227, 0.0
        %2245 = vadd.xlane.f32.xlu0 %v2244
        %v2246 = vpop.xlane.xlu0 %2245
        %v2247 = vsel %vm454, %v2229, 0.0
        %2248 = vadd.xlane.f32.xlu0 %v2247
        %v2249 = vpop.xlane.xlu0 %2248
        %v2250 = vsel %vm454, %v2231, 0.0
        %2251 = vadd.xlane.f32.xlu0 %v2250
        %v2252 = vpop.xlane.xlu0 %2251
        %v2253 = vsel %vm454, %v2233, 0.0
        %2254 = vadd.xlane.f32.xlu0 %v2253
        %v2255 = vpop.xlane.xlu0 %2254
        %v2256 = vsel %vm454, %v2235, 0.0
        %2257 = vadd.xlane.f32.xlu0 %v2256
        %v2258 = vpop.xlane.xlu0 %2257
        %v2259 = vsel %vm454, %v2237, 0.0
        %2260 = vadd.xlane.f32.xlu0 %v2259
        %v2261 = vpop.xlane.xlu0 %2260
        %v2262 = vrcp.pop %v2240
        %v2263 = vrcp.pop %v2243
        %v2264 = vrcp.pop %v2246
        %v2265 = vrcp.pop %v2249
        %v2266 = vrcp.pop %v2252
        %v2267 = vrcp.pop %v2255
        %v2268 = vrcp.pop %v2258
        %v2269 = vrcp.pop %v2261
        %v2270 = vmul.f32 %v2223, %v2262
        %v2271 = vmul.f32 %v2225, %v2263
        %v2272 = vmul.f32 %v2227, %v2264
        %v2273 = vmul.f32 %v2229, %v2265
        %v2274 = vmul.f32 %v2231, %v2266
        %v2275 = vmul.f32 %v2233, %v2267
        %v2276 = vmul.f32 %v2235, %v2268
        %v2277 = vmul.f32 %v2237, %v2269
        %v2279 = vsel %vm454, %v2270, 0
        %v2282 = vsel %vm454, %v2271, 0
        %v2285 = vsel %vm454, %v2272, 0
        %v2288 = vsel %vm454, %v2273, 0
        %v2291 = vsel %vm454, %v2274, 0
        %v2294 = vsel %vm454, %v2275, 0
        %v2297 = vsel %vm454, %v2276, 0
        %v2300 = vsel %vm454, %v2277, 0
        %2302 = vmatpush.msra.mxu0 0.0
        %2303 = vmatpush.msra.mxu0 0.0
        %2304 = vmatpush.msra.mxu0 0.0
        %2305 = vmatpush.msra.mxu0 0.0
        %2306 = vmatpush.msra.mxu0 0.0
        %2307 = vmatpush.msra.mxu0 0.0
        %2308 = vmatpush.msra.mxu0 0.0
        %2309 = vmatpush.msra.mxu0 0.0
        %2310 = vmatpush.msra.mxu0 %v684
        %2311 = vmatpush.msra.mxu0 %v681
        %2312 = vmatpush.msra.mxu0 %v678
        %2313 = vmatpush.msra.mxu0 %v675
        %2314 = vmatpush.msra.mxu0 %v672
        %2315 = vmatpush.msra.mxu0 %v669
        %2316 = vmatpush.msra.mxu0 %v666
        %2317 = vmatpush.msra.mxu0 %v663
        %2318 = vmatmul.f32.gmra.mxu0 %v2279
        %v2319 = vpop.f32.mrf.mxu0
        %v2320 = vadd.f32 0.0, %v2319
        %2321 = vmatmul.f32.gmra.mxu0 %v2282
        %v2322 = vpop.f32.mrf.mxu0
        %v2323 = vadd.f32 0.0, %v2322
        %2324 = vmatmul.f32.gmra.mxu0 %v2285
        %v2325 = vpop.f32.mrf.mxu0
        %v2326 = vadd.f32 0.0, %v2325
        %2327 = vmatmul.f32.gmra.mxu0 %v2288
        %v2328 = vpop.f32.mrf.mxu0
        %v2329 = vadd.f32 0.0, %v2328
        %2330 = vmatmul.f32.gmra.mxu0 %v2291
        %v2331 = vpop.f32.mrf.mxu0
        %v2332 = vadd.f32 0.0, %v2331
        %2333 = vmatmul.f32.gmra.mxu0 %v2294
        %v2334 = vpop.f32.mrf.mxu0
        %v2335 = vadd.f32 0.0, %v2334
        %2336 = vmatmul.f32.gmra.mxu0 %v2297
        %v2337 = vpop.f32.mrf.mxu0
        %v2338 = vadd.f32 0.0, %v2337
        %2339 = vmatmul.f32.gmra.mxu0 %v2300
        %v2340 = vpop.f32.mrf.mxu0
        %v2341 = vadd.f32 0.0, %v2340
        %2342 = vdwg.mxu0
        %2343 = vrot.lane.b32.xlu0 %v622, 96
        %v2344 = vpop.permute.xlu0 %2343
        %2345 = vrot.lane.b32.xlu0 %v625, 96
        %v2346 = vpop.permute.xlu0 %2345
        %2347 = vrot.lane.b32.xlu0 %v628, 96
        %v2348 = vpop.permute.xlu0 %2347
        %2349 = vrot.lane.b32.xlu0 %v631, 96
        %v2350 = vpop.permute.xlu0 %2349
        %2351 = vrot.lane.b32.xlu0 %v634, 96
        %v2352 = vpop.permute.xlu0 %2351
        %2353 = vrot.lane.b32.xlu0 %v637, 96
        %v2354 = vpop.permute.xlu0 %2353
        %2355 = vrot.lane.b32.xlu0 %v640, 96
        %v2356 = vpop.permute.xlu0 %2355
        %2357 = vrot.lane.b32.xlu0 %v643, 96
        %v2358 = vpop.permute.xlu0 %2357
        %2359 = vrot.lane.b32.xlu0 %v497, 48
        %v2360 = vpop.permute.xlu0 %2359
        %2361 = vrot.lane.b32.xlu0 %v500, 48
        %v2362 = vpop.permute.xlu0 %2361
        %2363 = vrot.lane.b32.xlu0 %v503, 48
        %v2364 = vpop.permute.xlu0 %2363
        %2365 = vrot.lane.b32.xlu0 %v506, 48
        %v2366 = vpop.permute.xlu0 %2365
        %2367 = vrot.lane.b32.xlu0 %v509, 48
        %v2368 = vpop.permute.xlu0 %2367
        %2369 = vrot.lane.b32.xlu0 %v512, 48
        %v2370 = vpop.permute.xlu0 %2369
        %2371 = vrot.lane.b32.xlu0 %v515, 48
        %v2372 = vpop.permute.xlu0 %2371
        %2373 = vrot.lane.b32.xlu0 %v518, 48
        %v2374 = vpop.permute.xlu0 %2373
        %v2375 = vsel %vm710, %v2344, 0
        %v2377 = vsel %vm710, %v2346, 0
        %v2379 = vsel %vm710, %v2348, 0
        %v2381 = vsel %vm710, %v2350, 0
        %v2383 = vsel %vm710, %v2352, 0
        %v2385 = vsel %vm710, %v2354, 0
        %v2387 = vsel %vm710, %v2356, 0
        %v2389 = vsel %vm710, %v2358, 0
        %v2391 = vsel %vm710, %v2360, 0
        %v2393 = vsel %vm710, %v2362, 0
        %v2395 = vsel %vm710, %v2364, 0
        %v2397 = vsel %vm710, %v2366, 0
        %v2399 = vsel %vm710, %v2368, 0
        %v2401 = vsel %vm710, %v2370, 0
        %v2403 = vsel %vm710, %v2372, 0
        %v2405 = vsel %vm710, %v2374, 0
        %2407 = vmatpush.xpose.msra.mxu0 0.0
        %2408 = vmatpush.xpose.msra.mxu0 0.0
        %2409 = vmatpush.xpose.msra.mxu0 0.0
        %2410 = vmatpush.xpose.msra.mxu0 0.0
        %2411 = vmatpush.xpose.msra.mxu0 0.0
        %2412 = vmatpush.xpose.msra.mxu0 0.0
        %2413 = vmatpush.xpose.msra.mxu0 0.0
        %2414 = vmatpush.xpose.msra.mxu0 0.0
        %2415 = vmatpush.xpose.msra.mxu0 %v2405
        %2416 = vmatpush.xpose.msra.mxu0 %v2403
        %2417 = vmatpush.xpose.msra.mxu0 %v2401
        %2418 = vmatpush.xpose.msra.mxu0 %v2399
        %2419 = vmatpush.xpose.msra.mxu0 %v2397
        %2420 = vmatpush.xpose.msra.mxu0 %v2395
        %2421 = vmatpush.xpose.msra.mxu0 %v2393
        %2422 = vmatpush.xpose.msra.mxu0 %v2391
        %2423 = vmatmul.f32.gmra.mxu0 %v2375
        %v2424 = vpop.f32.mrf.mxu0
        %v2425 = vadd.f32 0.0, %v2424
        %2426 = vmatmul.f32.gmra.mxu0 %v2377
        %v2427 = vpop.f32.mrf.mxu0
        %v2428 = vadd.f32 0.0, %v2427
        %2429 = vmatmul.f32.gmra.mxu0 %v2379
        %v2430 = vpop.f32.mrf.mxu0
        %v2431 = vadd.f32 0.0, %v2430
        %2432 = vmatmul.f32.gmra.mxu0 %v2381
        %v2433 = vpop.f32.mrf.mxu0
        %v2434 = vadd.f32 0.0, %v2433
        %2435 = vmatmul.f32.gmra.mxu0 %v2383
        %v2436 = vpop.f32.mrf.mxu0
        %v2437 = vadd.f32 0.0, %v2436
        %2438 = vmatmul.f32.gmra.mxu0 %v2385
        %v2439 = vpop.f32.mrf.mxu0
        %v2440 = vadd.f32 0.0, %v2439
        %2441 = vmatmul.f32.gmra.mxu0 %v2387
        %v2442 = vpop.f32.mrf.mxu0
        %v2443 = vadd.f32 0.0, %v2442
        %2444 = vmatmul.f32.gmra.mxu0 %v2389
        %v2445 = vpop.f32.mrf.mxu0
        %v2446 = vadd.f32 0.0, %v2445
        %2447 = vdwg.mxu0
        %v2448 = vsel %vm454, %v2425, -inf
        %2449 = vmax.xlane.f32.xlu0 %v2448
        %v2450 = vpop.xlane.xlu0 %2449
        %v2451 = vsel %vm454, %v2428, -inf
        %2452 = vmax.xlane.f32.xlu0 %v2451
        %v2453 = vpop.xlane.xlu0 %2452
        %v2454 = vsel %vm454, %v2431, -inf
        %2455 = vmax.xlane.f32.xlu0 %v2454
        %v2456 = vpop.xlane.xlu0 %2455
        %v2457 = vsel %vm454, %v2434, -inf
        %2458 = vmax.xlane.f32.xlu0 %v2457
        %v2459 = vpop.xlane.xlu0 %2458
        %v2460 = vsel %vm454, %v2437, -inf
        %2461 = vmax.xlane.f32.xlu0 %v2460
        %v2462 = vpop.xlane.xlu0 %2461
        %v2463 = vsel %vm454, %v2440, -inf
        %2464 = vmax.xlane.f32.xlu0 %v2463
        %v2465 = vpop.xlane.xlu0 %2464
        %v2466 = vsel %vm454, %v2443, -inf
        %2467 = vmax.xlane.f32.xlu0 %v2466
        %v2468 = vpop.xlane.xlu0 %2467
        %v2469 = vsel %vm454, %v2446, -inf
        %2470 = vmax.xlane.f32.xlu0 %v2469
        %v2471 = vpop.xlane.xlu0 %2470
        %v2472 = vsub.f32 %v2425, %v2450
        %v2473 = vsub.f32 %v2428, %v2453
        %v2474 = vsub.f32 %v2431, %v2456
        %v2475 = vsub.f32 %v2434, %v2459
        %v2476 = vsub.f32 %v2437, %v2462
        %v2477 = vsub.f32 %v2440, %v2465
        %v2478 = vsub.f32 %v2443, %v2468
        %v2479 = vsub.f32 %v2446, %v2471
        %v2480 = vmul.f32 %v2472, 1.442695
        %v2481 = vpow.pop %v2480
        %v2482 = vmul.f32 %v2473, 1.442695
        %v2483 = vpow.pop %v2482
        %v2484 = vmul.f32 %v2474, 1.442695
        %v2485 = vpow.pop %v2484
        %v2486 = vmul.f32 %v2475, 1.442695
        %v2487 = vpow.pop %v2486
        %v2488 = vmul.f32 %v2476, 1.442695
        %v2489 = vpow.pop %v2488
        %v2490 = vmul.f32 %v2477, 1.442695
        %v2491 = vpow.pop %v2490
        %v2492 = vmul.f32 %v2478, 1.442695
        %v2493 = vpow.pop %v2492
        %v2494 = vmul.f32 %v2479, 1.442695
        %v2495 = vpow.pop %v2494
        %v2496 = vsel %vm454, %v2481, 0.0
        %2497 = vadd.xlane.f32.xlu0 %v2496
        %v2498 = vpop.xlane.xlu0 %2497
        %v2499 = vsel %vm454, %v2483, 0.0
        %2500 = vadd.xlane.f32.xlu0 %v2499
        %v2501 = vpop.xlane.xlu0 %2500
        %v2502 = vsel %vm454, %v2485, 0.0
        %2503 = vadd.xlane.f32.xlu0 %v2502
        %v2504 = vpop.xlane.xlu0 %2503
        %v2505 = vsel %vm454, %v2487, 0.0
        %2506 = vadd.xlane.f32.xlu0 %v2505
        %v2507 = vpop.xlane.xlu0 %2506
        %v2508 = vsel %vm454, %v2489, 0.0
        %2509 = vadd.xlane.f32.xlu0 %v2508
        %v2510 = vpop.xlane.xlu0 %2509
        %v2511 = vsel %vm454, %v2491, 0.0
        %2512 = vadd.xlane.f32.xlu0 %v2511
        %v2513 = vpop.xlane.xlu0 %2512
        %v2514 = vsel %vm454, %v2493, 0.0
        %2515 = vadd.xlane.f32.xlu0 %v2514
        %v2516 = vpop.xlane.xlu0 %2515
        %v2517 = vsel %vm454, %v2495, 0.0
        %2518 = vadd.xlane.f32.xlu0 %v2517
        %v2519 = vpop.xlane.xlu0 %2518
        %v2520 = vrcp.pop %v2498
        %v2521 = vrcp.pop %v2501
        %v2522 = vrcp.pop %v2504
        %v2523 = vrcp.pop %v2507
        %v2524 = vrcp.pop %v2510
        %v2525 = vrcp.pop %v2513
        %v2526 = vrcp.pop %v2516
        %v2527 = vrcp.pop %v2519
        %v2528 = vmul.f32 %v2481, %v2520
        %v2529 = vmul.f32 %v2483, %v2521
        %v2530 = vmul.f32 %v2485, %v2522
        %v2531 = vmul.f32 %v2487, %v2523
        %v2532 = vmul.f32 %v2489, %v2524
        %v2533 = vmul.f32 %v2491, %v2525
        %v2534 = vmul.f32 %v2493, %v2526
        %v2535 = vmul.f32 %v2495, %v2527
        %v2537 = vsel %vm454, %v2528, 0
        %v2540 = vsel %vm454, %v2529, 0
        %v2543 = vsel %vm454, %v2530, 0
        %v2546 = vsel %vm454, %v2531, 0
        %v2549 = vsel %vm454, %v2532, 0
        %v2552 = vsel %vm454, %v2533, 0
        %v2555 = vsel %vm454, %v2534, 0
        %v2558 = vsel %vm454, %v2535, 0
        %2560 = vmatpush.msra.mxu0 0.0
        %2561 = vmatpush.msra.mxu0 0.0
        %2562 = vmatpush.msra.mxu0 0.0
        %2563 = vmatpush.msra.mxu0 0.0
        %2564 = vmatpush.msra.mxu0 0.0
        %2565 = vmatpush.msra.mxu0 0.0
        %2566 = vmatpush.msra.mxu0 0.0
        %2567 = vmatpush.msra.mxu0 0.0
        %2568 = vmatpush.msra.mxu0 %v559
        %2569 = vmatpush.msra.mxu0 %v556
        %2570 = vmatpush.msra.mxu0 %v553
        %2571 = vmatpush.msra.mxu0 %v550
        %2572 = vmatpush.msra.mxu0 %v547
        %2573 = vmatpush.msra.mxu0 %v544
        %2574 = vmatpush.msra.mxu0 %v541
        %2575 = vmatpush.msra.mxu0 %v538
        %2576 = vmatmul.f32.gmra.mxu0 %v2537
        %v2577 = vpop.f32.mrf.mxu0
        %v2578 = vadd.f32 0.0, %v2577
        %2579 = vmatmul.f32.gmra.mxu0 %v2540
        %v2580 = vpop.f32.mrf.mxu0
        %v2581 = vadd.f32 0.0, %v2580
        %2582 = vmatmul.f32.gmra.mxu0 %v2543
        %v2583 = vpop.f32.mrf.mxu0
        %v2584 = vadd.f32 0.0, %v2583
        %2585 = vmatmul.f32.gmra.mxu0 %v2546
        %v2586 = vpop.f32.mrf.mxu0
        %v2587 = vadd.f32 0.0, %v2586
        %2588 = vmatmul.f32.gmra.mxu0 %v2549
        %v2589 = vpop.f32.mrf.mxu0
        %v2590 = vadd.f32 0.0, %v2589
        %2591 = vmatmul.f32.gmra.mxu0 %v2552
        %v2592 = vpop.f32.mrf.mxu0
        %v2593 = vadd.f32 0.0, %v2592
        %2594 = vmatmul.f32.gmra.mxu0 %v2555
        %v2595 = vpop.f32.mrf.mxu0
        %v2596 = vadd.f32 0.0, %v2595
        %2597 = vmatmul.f32.gmra.mxu0 %v2558
        %v2598 = vpop.f32.mrf.mxu0
        %v2599 = vadd.f32 0.0, %v2598
        %2600 = vdwg.mxu0
        %s2601 = scalar_lea.vmem [#allocation7], 32
        %v2602 = vld [vmem:[%s2601] sm:$0xff]
        %v2603 = vld [vmem:[%s2601 + $0x8] sm:$0xff]
        %v2605 = vsel %vm710, %v2320, 0
        %v2608 = vsel %vm710, %v2323, 0
        %v2611 = vsel %vm710, %v2326, 0
        %v2614 = vsel %vm710, %v2329, 0
        %v2617 = vsel %vm710, %v2332, 0
        %v2620 = vsel %vm710, %v2335, 0
        %v2623 = vsel %vm710, %v2338, 0
        %v2626 = vsel %vm710, %v2341, 0
        %2628 = vmatpush.msra.mxu0 0.0
        %2629 = vmatpush.msra.mxu0 0.0
        %2630 = vmatpush.msra.mxu0 0.0
        %2631 = vmatpush.msra.mxu0 0.0
        %2632 = vmatpush.msra.mxu0 0.0
        %2633 = vmatpush.msra.mxu0 0.0
        %2634 = vmatpush.msra.mxu0 0.0
        %2635 = vmatpush.msra.mxu0 0.0
        %2636 = vmatpush.msra.mxu0 0.0
        %2637 = vmatpush.msra.mxu0 0.0
        %2638 = vmatpush.msra.mxu0 0.0
        %2639 = vmatpush.msra.mxu0 0.0
        %2640 = vmatpush.msra.mxu0 0.0
        %2641 = vmatpush.msra.mxu0 0.0
        %2642 = vmatpush.msra.mxu0 %v2603
        %2643 = vmatpush.msra.mxu0 %v2602
        %2644 = vmatmul.f32.gmra.mxu0 %v2605
        %v2645 = vpop.f32.mrf.mxu0
        %v2646 = vadd.f32 0.0, %v2645
        %2647 = vmatmul.f32.gmra.mxu0 %v2608
        %v2648 = vpop.f32.mrf.mxu0
        %v2649 = vadd.f32 0.0, %v2648
        %2650 = vmatmul.f32.gmra.mxu0 %v2611
        %v2651 = vpop.f32.mrf.mxu0
        %v2652 = vadd.f32 0.0, %v2651
        %2653 = vmatmul.f32.gmra.mxu0 %v2614
        %v2654 = vpop.f32.mrf.mxu0
        %v2655 = vadd.f32 0.0, %v2654
        %2656 = vmatmul.f32.gmra.mxu0 %v2617
        %v2657 = vpop.f32.mrf.mxu0
        %v2658 = vadd.f32 0.0, %v2657
        %2659 = vmatmul.f32.gmra.mxu0 %v2620
        %v2660 = vpop.f32.mrf.mxu0
        %v2661 = vadd.f32 0.0, %v2660
        %2662 = vmatmul.f32.gmra.mxu0 %v2623
        %v2663 = vpop.f32.mrf.mxu0
        %v2664 = vadd.f32 0.0, %v2663
        %2665 = vmatmul.f32.gmra.mxu0 %v2626
        %v2666 = vpop.f32.mrf.mxu0
        %v2667 = vadd.f32 0.0, %v2666
        %2668 = vdwg.mxu0
        %v2669 = vadd.f32 %v2077, %v2646
        %v2670 = vadd.f32 %v2078, %v2649
        %v2671 = vadd.f32 %v2079, %v2652
        %v2672 = vadd.f32 %v2080, %v2655
        %v2673 = vadd.f32 %v2081, %v2658
        %v2674 = vadd.f32 %v2082, %v2661
        %v2675 = vadd.f32 %v2083, %v2664
        %v2676 = vadd.f32 %v2084, %v2667
        %s2677 = scalar_lea.vmem [#allocation8], 32
        %v2678 = vld [vmem:[%s2677] sm:$0xff]
        %v2679 = vld [vmem:[%s2677 + $0x8] sm:$0xff]
        %v2681 = vsel %vm710, %v2578, 0
        %v2684 = vsel %vm710, %v2581, 0
        %v2687 = vsel %vm710, %v2584, 0
        %v2690 = vsel %vm710, %v2587, 0
        %v2693 = vsel %vm710, %v2590, 0
        %v2696 = vsel %vm710, %v2593, 0
        %v2699 = vsel %vm710, %v2596, 0
        %v2702 = vsel %vm710, %v2599, 0
        %2704 = vmatpush.msra.mxu0 0.0
        %2705 = vmatpush.msra.mxu0 0.0
        %2706 = vmatpush.msra.mxu0 0.0
        %2707 = vmatpush.msra.mxu0 0.0
        %2708 = vmatpush.msra.mxu0 0.0
        %2709 = vmatpush.msra.mxu0 0.0
        %2710 = vmatpush.msra.mxu0 0.0
        %2711 = vmatpush.msra.mxu0 0.0
        %2712 = vmatpush.msra.mxu0 0.0
        %2713 = vmatpush.msra.mxu0 0.0
        %2714 = vmatpush.msra.mxu0 0.0
        %2715 = vmatpush.msra.mxu0 0.0
        %2716 = vmatpush.msra.mxu0 0.0
        %2717 = vmatpush.msra.mxu0 0.0
        %2718 = vmatpush.msra.mxu0 %v2679
        %2719 = vmatpush.msra.mxu0 %v2678
        %2720 = vmatmul.f32.gmra.mxu0 %v2681
        %v2721 = vpop.f32.mrf.mxu0
        %v2722 = vadd.f32 0.0, %v2721
        %2723 = vmatmul.f32.gmra.mxu0 %v2684
        %v2724 = vpop.f32.mrf.mxu0
        %v2725 = vadd.f32 0.0, %v2724
        %2726 = vmatmul.f32.gmra.mxu0 %v2687
        %v2727 = vpop.f32.mrf.mxu0
        %v2728 = vadd.f32 0.0, %v2727
        %2729 = vmatmul.f32.gmra.mxu0 %v2690
        %v2730 = vpop.f32.mrf.mxu0
        %v2731 = vadd.f32 0.0, %v2730
        %2732 = vmatmul.f32.gmra.mxu0 %v2693
        %v2733 = vpop.f32.mrf.mxu0
        %v2734 = vadd.f32 0.0, %v2733
        %2735 = vmatmul.f32.gmra.mxu0 %v2696
        %v2736 = vpop.f32.mrf.mxu0
        %v2737 = vadd.f32 0.0, %v2736
        %2738 = vmatmul.f32.gmra.mxu0 %v2699
        %v2739 = vpop.f32.mrf.mxu0
        %v2740 = vadd.f32 0.0, %v2739
        %2741 = vmatmul.f32.gmra.mxu0 %v2702
        %v2742 = vpop.f32.mrf.mxu0
        %v2743 = vadd.f32 0.0, %v2742
        %2744 = vdwg.mxu0
        %v2745 = vadd.f32 %v2669, %v2722
        %v2746 = vadd.f32 %v2670, %v2725
        %v2747 = vadd.f32 %v2671, %v2728
        %v2748 = vadd.f32 %v2672, %v2731
        %v2749 = vadd.f32 %v2673, %v2734
        %v2750 = vadd.f32 %v2674, %v2737
        %v2751 = vadd.f32 %v2675, %v2740
        %v2752 = vadd.f32 %v2676, %v2743
        %v2753 = vld [vmem:[%s8] sm:$0x1]
        %v2755 = vperm.slane %v2753, 0
        %v2757 = vadd.f32 %v2745, %v2755
        %v2758 = vadd.f32 %v2746, %v2755
        %v2759 = vadd.f32 %v2747, %v2755
        %v2760 = vadd.f32 %v2748, %v2755
        %v2761 = vadd.f32 %v2749, %v2755
        %v2762 = vadd.f32 %v2750, %v2755
        %v2763 = vadd.f32 %v2751, %v2755
        %v2764 = vadd.f32 %v2752, %v2755
        %v2765 = vmax.f32 %v2757, 0.0
        %v2766 = vmax.f32 %v2758, 0.0
        %v2767 = vmax.f32 %v2759, 0.0
        %v2768 = vmax.f32 %v2760, 0.0
        %v2769 = vmax.f32 %v2761, 0.0
        %v2770 = vmax.f32 %v2762, 0.0
        %v2771 = vmax.f32 %v2763, 0.0
        %v2772 = vmax.f32 %v2764, 0.0
        %2773 = vxpose.xlu0.b32.start [1/16] %v2765, 128
        %2774 = vxpose.xlu0.b32.cont [2/16] %v2766, 128
        %2775 = vxpose.xlu0.b32.cont [3/16] %v2767, 128
        %2776 = vxpose.xlu0.b32.cont [4/16] %v2768, 128
        %2777 = vxpose.xlu0.b32.cont [5/16] %v2769, 128
        %2778 = vxpose.xlu0.b32.cont [6/16] %v2770, 128
        %2779 = vxpose.xlu0.b32.cont [7/16] %v2771, 128
        %2780 = vxpose.xlu0.b32.cont [8/16] %v2772, 128
        %2781 = vxpose.xlu0.b32.cont [9/16] 0.0, 128
        %2782 = vxpose.xlu0.b32.cont [10/16] 0.0, 128
        %2783 = vxpose.xlu0.b32.cont [11/16] 0.0, 128
        %2784 = vxpose.xlu0.b32.cont [12/16] 0.0, 128
        %2785 = vxpose.xlu0.b32.cont [13/16] 0.0, 128
        %2786 = vxpose.xlu0.b32.cont [14/16] 0.0, 128
        %2787 = vxpose.xlu0.b32.cont [15/16] 0.0, 128
        %2788 = vxpose.xlu0.b32.end [16/16] 0.0, 128
        %v2789 = vpop.trf.xlu0
        %v2790 = vpop.trf.xlu0
        %v2791 = vpop.trf.xlu0
        %v2792 = vpop.trf.xlu0
        %v2793 = vpop.trf.xlu0
        %v2794 = vpop.trf.xlu0
        %v2795 = vpop.trf.xlu0
        %v2796 = vpop.trf.xlu0
        %v2797 = vpop.trf.xlu0
        %v2798 = vpop.trf.xlu0
        %v2799 = vpop.trf.xlu0
        %v2800 = vpop.trf.xlu0
        %v2801 = vpop.trf.xlu0
        %v2802 = vpop.trf.xlu0
        %v2803 = vpop.trf.xlu0
        %v2804 = vpop.trf.xlu0
        %2805 = vst.msk [vmem:[%s405] sm:$0xff] %vm454, %v2789
        %2806 = vst.msk [vmem:[%s405 + $0x8] sm:$0xff] %vm454, %v2790
        %2807 = vst.msk [vmem:[%s405 + $0x10] sm:$0xff] %vm454, %v2791
        %2808 = vst.msk [vmem:[%s405 + $0x18] sm:$0xff] %vm454, %v2792
        %2809 = vst.msk [vmem:[%s405 + $0x20] sm:$0xff] %vm454, %v2793
        %2810 = vst.msk [vmem:[%s405 + $0x28] sm:$0xff] %vm454, %v2794
        %s2811 = sand.u32 %s233, 1
        %s2812 = scalar_lea.sflag [#allocation4], %s2811
        %s2813 = sand.u32 %s233, 1
        %s2814 = smul.addr %s2813, 48
        %s2815 = scalar_lea.vmem [#allocation10], %s2814
        // Predicated region
        $region73: #{tpu_custom_call.1} parent=55 // pred_check
          %p2816 = pneg %p243
        $region74: #{tpu_custom_call.1} parent=55 // pred_check_branch
          %2818 = sbr.rel (%p2816) target = $region76
        $region75: #{tpu_custom_call.1} parent=55 // pred_region
          %2820 = vsyncadd %s2812, 0
          %s2821 = smul.addr %s26, 6
          %s2822 = smul.addr %s2821, 8
          %s2823 = scalar_lea.hbm %s9, %s2822
          %s2824 = sshll.u32 %s2815, 4
          %s2825 = int_to_ptr.vmem [resolvable:$true] %s2824
          %s2826 = sshll.u32 %s2823, 4
          %s2827 = int_to_ptr.hbm [resolvable:$true] %s2826
          %2832 = dma.vmem_to_hbm [thread:$0]  %s2825, 768, %s2827, %s2812, 128, 128, 8
        $region76: #{tpu_custom_call.1} parent=55 // pred_fallthru
          _
      $region56: #{tpu_custom_call.1} parent=5 // pred_fallthru
        _
      %p2833 = scmp.le.s32.totalorder 2, %s21
      // Predicated region
      $region77: #{tpu_custom_call.1} parent=5 // pred_check
        %p2834 = pneg %p2833
      $region78: #{tpu_custom_call.1} parent=5 // pred_check_branch
        %2836 = sbr.rel (%p2834) target = $region80
      $region79: #{tpu_custom_call.1} parent=5 // pred_region
        %s2837 = ssub.s32 %s21, 2
        // Predicated region
        $region81: #{tpu_custom_call.1} parent=79 // pred_check
          %p2838 = pneg %p249
        $region82: #{tpu_custom_call.1} parent=79 // pred_check_branch
          %2840 = sbr.rel (%p2838) target = $region84
        $region83: #{tpu_custom_call.1} parent=79 // pred_region
          %s2841 = sand.u32 %s234, 1
          %s2842 = scalar_lea.sflag [#allocation4], %s2841
          %s2843 = sand.u32 %s234, 1
          %s2844 = smul.addr %s2843, 48
          %s2845 = scalar_lea.vmem [#allocation10], %s2844
          %2847 = dma.done %s2842, 768
        $region84: #{tpu_custom_call.1} parent=79 // pred_fallthru
          _
      $region80: #{tpu_custom_call.1} parent=5 // pred_fallthru
        _
    $region6: #{tpu_custom_call.1} parent=1 // loop_footer
      %s25 = sadd.s32 1, %s21
    $region7: #{tpu_custom_call.1} parent=1 // loop_footer_branch
      %20 = sbr.rel target = $region3
    $region8: #{tpu_custom_call.1} parent=1 // loop_exit
      _
    %2848 = vsyncpa [#allocation3], 1
    %s2849 = scalar_lea.sflag [#allocation3], 1
    %2850 = vsyncpa %s2849, 1
    %2851 = vsyncpa [#allocation6], 1
    %2852 = vsyncpa [#allocation9], 1
    %2853 = vsyncpa [#allocation4], 1
    %s2854 = scalar_lea.sflag [#allocation4], 1
    %2855 = vsyncpa %s2854, 1

</llo_original>
